<compile_context>
chip_gen: v7x
topology: tpu7x:2x2x1
jax: 0.10.0
libtpu: 0.0.40
codegen_flags: <defaults>
</compile_context>

<pallas_src>
import jax
import jax.numpy as jnp
from jax.experimental import pallas as pl
from jax.experimental.pallas import tpu as pltpu


def cvae_kernel(x_ref, c_ref, eps_ref,
                we0x_ref, we0c_ref, be0_ref,
                we1_ref, be1_ref,
                wmu_ref, bmu_ref, wlv_ref, blv_ref,
                wd0_ref, bd0_ref, wd1_ref, bd1_ref,
                recon_ref, kldrow_ref):
    f32 = jnp.float32
    bf16 = jnp.bfloat16

    # ---- encoder layer 0: split-weight form of concat([x, c]) @ W0 + b0 ----
    h = (jnp.dot(x_ref[...].astype(bf16), we0x_ref[...], preferred_element_type=f32)
         + jnp.dot(c_ref[...].astype(bf16), we0c_ref[...], preferred_element_type=f32)
         + be0_ref[...])
    h = jnp.maximum(h, 0.0)

    # ---- encoder layer 1: Linear + ReLU ----
    h = jnp.maximum(
        jnp.dot(h.astype(bf16), we1_ref[...], preferred_element_type=f32)
        + be1_ref[...], 0.0)

    # ---- latent heads (share one bf16 cast of h) ----
    hb = h.astype(bf16)
    mu = jnp.dot(hb, wmu_ref[...], preferred_element_type=f32) + bmu_ref[...]
    lv = jnp.dot(hb, wlv_ref[...], preferred_element_type=f32) + blv_ref[...]

    # ---- reparameterization: z = mu + exp(0.5 * log_var) * eps ----
    std = jnp.exp(0.5 * lv)                 # EUP; reused below for the KLD
    z = mu + std * eps_ref[...]

    # ---- decoder MLP: Linear + ReLU, final Linear + Sigmoid ----
    d = jnp.maximum(
        jnp.dot(z.astype(bf16), wd0_ref[...], preferred_element_type=f32)
        + bd0_ref[...], 0.0)
    logits = (jnp.dot(d.astype(bf16), wd1_ref[...], preferred_element_type=f32)
              + bd1_ref[...])
    # Exact sigmoid (guaranteed in [0, 1]); the exp lands on the EUP slot.
    recon_ref[...] = 1.0 / (1.0 + jnp.exp(-logits))

    # ---- per-row KLD partial sums: -0.5 * sum_j(1 + lv - mu^2 - exp(lv)) ----
    # exp(lv) == std*std (reuse of the reparameterization exponential).
    kldrow_ref[...] = -0.5 * jnp.sum(1.0 + lv - mu * mu - std * std,
                                     axis=-1, keepdims=True)


def cvae_forward(x, c, eps, params, *, tb=128):
    """Runs the CVAE forward pass. Returns (recon_x, KLD)."""
    batch, x_dim = x.shape
    c_dim = c.shape[1]
    latent = eps.shape[1]
    out_dim = params["wd1"].shape[1]

    # Pad the batch to a multiple of the tile; padded rows are sliced off below
    # (their per-row KLD contributions are dropped before the final sum).
    num_tiles = pl.cdiv(batch, tb)
    padded = num_tiles * tb
    if padded != batch:
        pad = padded - batch
        x = jnp.pad(x, ((0, pad), (0, 0)))
        c = jnp.pad(c, ((0, pad), (0, 0)))
        eps = jnp.pad(eps, ((0, pad), (0, 0)))

    def tiled(feat):
        # Batch-tiled activation tensor: one (tb, feat) block per grid step.
        return pl.BlockSpec((tb, feat), lambda i: (i, 0))

    def resident(arr):
        # Weight/bias: constant block index -> DMA'd once, stays in VMEM.
        return pl.BlockSpec(arr.shape, lambda i: (0, 0))

    weight_names = ("we0x", "we0c", "be0", "we1", "be1",
                    "wmu", "bmu", "wlv", "blv",
                    "wd0", "bd0", "wd1", "bd1")
    weights = [params[n] for n in weight_names]

    recon, kld_rows = pl.pallas_call(
        cvae_kernel,
        grid=(num_tiles,),
        out_shape=(jax.ShapeDtypeStruct((padded, out_dim), jnp.float32),
                   jax.ShapeDtypeStruct((padded, 1), jnp.float32)),
        in_specs=[tiled(x_dim), tiled(c_dim), tiled(latent)]
                 + [resident(w) for w in weights],
        out_specs=(tiled(out_dim), tiled(1)),
        compiler_params=pltpu.CompilerParams(
            # Batch tiles are independent -> shardable across v7x's 2 TensorCores.
            dimension_semantics=("parallel",)),
    )(x, c, eps, *weights)

    recon = recon[:batch]
    kld = jnp.sum(kld_rows[:batch, 0])   # tiny final reduce over per-row partials
    return recon, kld


def _init_params(key, input_layer_size, latent_size, output_layer_size,
                 x_dim):
    """Deterministic parameter init mirroring the module's layer shapes.

    Weights are stored as (in, out) bf16 (MXU operands); biases as (1, out) f32.
    The first encoder weight is pre-split along its input axis into the x- and
    c- halves so the kernel never needs a concatenated activation.
    """
    params = {}

    def linear(key, in_dim, out_dim):
        k_w, k_b = jax.random.split(key)
        scale = 1.0 / jnp.sqrt(jnp.float32(in_dim))
        w = jax.random.uniform(k_w, (in_dim, out_dim), jnp.float32, -scale, scale)
        b = jax.random.uniform(k_b, (1, out_dim), jnp.float32, -scale, scale)
        return w.astype(jnp.bfloat16), b

    keys = jax.random.split(key, 6)
    # encoder MLP layers
    w0, params["be0"] = linear(keys[0], input_layer_size[0], input_layer_size[1])
    params["we0x"], params["we0c"] = w0[:x_dim], w0[x_dim:]
    params["we1"], params["be1"] = linear(keys[1], input_layer_size[1], input_layer_size[2])
    # latent heads
    params["wmu"], params["bmu"] = linear(keys[2], input_layer_size[-1], latent_size)
    params["wlv"], params["blv"] = linear(keys[3], input_layer_size[-1], latent_size)
    # decoder MLP layers
    params["wd0"], params["bd0"] = linear(keys[4], latent_size, output_layer_size[0])
    params["wd1"], params["bd1"] = linear(keys[5], output_layer_size[0], output_layer_size[1])
    return params


if __name__ == "__main__":
    # Shapes consistent with the module:
    #   x: (batch, x_dim), c: (batch, c_dim)
    #   input_layer_size[0] == x_dim + c_dim (encoder consumes concat(x, c))
    # Batch is a couple of 128-row tiles so the grid/pipeline path is exercised.
    # TODO(synk): feature dims (16/24/32) are far below the 128-lane vreg width;
    # lane padding is inherent to the module's layer sizes.
    batch, x_dim, c_dim = 256, 16, 8
    input_layer_size = [x_dim + c_dim, 32, 32]
    latent_size = 16
    output_layer_size = [32, x_dim]

    root = jax.random.PRNGKey(0)
    k_x, k_c, k_eps, k_params = jax.random.split(root, 4)

    x = jax.random.normal(k_x, (batch, x_dim), jnp.float32)
    c = jax.random.normal(k_c, (batch, c_dim), jnp.float32)
    eps = jax.random.normal(k_eps, (batch, latent_size), jnp.float32)  # randn_like(std)
    params = _init_params(k_params, input_layer_size, latent_size,
                          output_layer_size, x_dim)

    recon_x, kld = cvae_forward(x, c, eps, params)
    jax.block_until_ready((recon_x, kld))

    assert recon_x.shape == (batch, x_dim)
    assert recon_x.dtype == jnp.float32
    assert kld.shape == ()
    assert bool(jnp.all((recon_x >= 0.0) & (recon_x <= 1.0)))  # sigmoid output range
    assert bool(jnp.isfinite(kld))

    print("KERNEL_OK")
</pallas_src>

<mosaic_0001>
module attributes {stable_mosaic.version = 11 : i64} {
  func.func @cvae_kernel(%arg0: i32, %arg1: memref<128x16xf32, #tpu.memory_space<vmem>>, %arg2: memref<128x8xf32, #tpu.memory_space<vmem>>, %arg3: memref<128x16xf32, #tpu.memory_space<vmem>>, %arg4: memref<16x32xbf16, #tpu.memory_space<vmem>>, %arg5: memref<8x32xbf16, #tpu.memory_space<vmem>>, %arg6: memref<1x32xf32, #tpu.memory_space<vmem>>, %arg7: memref<32x32xbf16, #tpu.memory_space<vmem>>, %arg8: memref<1x32xf32, #tpu.memory_space<vmem>>, %arg9: memref<32x16xbf16, #tpu.memory_space<vmem>>, %arg10: memref<1x16xf32, #tpu.memory_space<vmem>>, %arg11: memref<32x16xbf16, #tpu.memory_space<vmem>>, %arg12: memref<1x16xf32, #tpu.memory_space<vmem>>, %arg13: memref<16x32xbf16, #tpu.memory_space<vmem>>, %arg14: memref<1x32xf32, #tpu.memory_space<vmem>>, %arg15: memref<32x16xbf16, #tpu.memory_space<vmem>>, %arg16: memref<1x16xf32, #tpu.memory_space<vmem>>, %arg17: memref<128x16xf32, #tpu.memory_space<vmem>>, %arg18: memref<128x1xf32, #tpu.memory_space<vmem>>) attributes {dimension_semantics = [#tpu.dimension_semantics<parallel>], iteration_bounds = array<i64: 2>, scalar_prefetch = 0 : i64, scratch_operands = 0 : i64, tpu.core_type = #tpu.core_type<tc>, window_params = [{transform_indices = @transform_0, window_bounds = array<i64: 128, 16>}, {transform_indices = @transform_1, window_bounds = array<i64: 128, 8>}, {transform_indices = @transform_2, window_bounds = array<i64: 128, 16>}, {pipeline_mode = #tpu.pipeline_mode<synchronous>, transform_indices = @transform_3, window_bounds = array<i64: 16, 32>}, {pipeline_mode = #tpu.pipeline_mode<synchronous>, transform_indices = @transform_4, window_bounds = array<i64: 8, 32>}, {pipeline_mode = #tpu.pipeline_mode<synchronous>, transform_indices = @transform_5, window_bounds = array<i64: 1, 32>}, {pipeline_mode = #tpu.pipeline_mode<synchronous>, transform_indices = @transform_6, window_bounds = array<i64: 32, 32>}, {pipeline_mode = #tpu.pipeline_mode<synchronous>, transform_indices = @transform_7, window_bounds = array<i64: 1, 32>}, {pipeline_mode = #tpu.pipeline_mode<synchronous>, transform_indices = @transform_8, window_bounds = array<i64: 32, 16>}, {pipeline_mode = #tpu.pipeline_mode<synchronous>, transform_indices = @transform_9, window_bounds = array<i64: 1, 16>}, {pipeline_mode = #tpu.pipeline_mode<synchronous>, transform_indices = @transform_10, window_bounds = array<i64: 32, 16>}, {pipeline_mode = #tpu.pipeline_mode<synchronous>, transform_indices = @transform_11, window_bounds = array<i64: 1, 16>}, {pipeline_mode = #tpu.pipeline_mode<synchronous>, transform_indices = @transform_12, window_bounds = array<i64: 16, 32>}, {pipeline_mode = #tpu.pipeline_mode<synchronous>, transform_indices = @transform_13, window_bounds = array<i64: 1, 32>}, {pipeline_mode = #tpu.pipeline_mode<synchronous>, transform_indices = @transform_14, window_bounds = array<i64: 32, 16>}, {pipeline_mode = #tpu.pipeline_mode<synchronous>, transform_indices = @transform_15, window_bounds = array<i64: 1, 16>}, {transform_indices = @transform_16, window_bounds = array<i64: 128, 16>}, {transform_indices = @transform_17, window_bounds = array<i64: 128, 1>}]} {
    %c0 = arith.constant 0 : index
    %c0_0 = arith.constant 0 : index
    %0 = vector.load %arg1[%c0, %c0_0] : memref<128x16xf32, #tpu.memory_space<vmem>>, vector<128x16xf32>
    %1 = arith.truncf %0 : vector<128x16xf32> to vector<128x16xbf16>
    %c0_1 = arith.constant 0 : index
    %c0_2 = arith.constant 0 : index
    %2 = vector.load %arg4[%c0_1, %c0_2] : memref<16x32xbf16, #tpu.memory_space<vmem>>, vector<16x32xbf16>
    %cst = arith.constant dense<0.000000e+00> : vector<128x32xf32>
    %3 = tpu.matmul %1, %2, %cst {dimension_numbers = #tpu.dot_dimension_numbers<[1], [0], [0], [1], [0, 0, 1, 1], [], []>} : vector<128x16xbf16>, vector<16x32xbf16>, vector<128x32xf32> -> vector<128x32xf32>
    %c0_3 = arith.constant 0 : index
    %c0_4 = arith.constant 0 : index
    %4 = vector.load %arg2[%c0_3, %c0_4] : memref<128x8xf32, #tpu.memory_space<vmem>>, vector<128x8xf32>
    %5 = arith.truncf %4 : vector<128x8xf32> to vector<128x8xbf16>
    %c0_5 = arith.constant 0 : index
    %c0_6 = arith.constant 0 : index
    %6 = vector.load %arg5[%c0_5, %c0_6] : memref<8x32xbf16, #tpu.memory_space<vmem>>, vector<8x32xbf16>
    %cst_7 = arith.constant dense<0.000000e+00> : vector<128x32xf32>
    %7 = tpu.matmul %5, %6, %cst_7 {dimension_numbers = #tpu.dot_dimension_numbers<[1], [0], [0], [1], [0, 0, 1, 1], [], []>} : vector<128x8xbf16>, vector<8x32xbf16>, vector<128x32xf32> -> vector<128x32xf32>
    %8 = arith.addf %3, %7 : vector<128x32xf32>
    %c0_8 = arith.constant 0 : index
    %c0_9 = arith.constant 0 : index
    %9 = vector.load %arg6[%c0_8, %c0_9] : memref<1x32xf32, #tpu.memory_space<vmem>>, vector<1x32xf32>
    %10 = vector.broadcast %9 : vector<1x32xf32> to vector<128x32xf32>
    %11 = arith.addf %8, %10 : vector<128x32xf32>
    %cst_10 = arith.constant 0.000000e+00 : f32
    %12 = vector.broadcast %cst_10 : f32 to vector<128x32xf32>
    %13 = arith.maximumf %11, %12 : vector<128x32xf32>
    %14 = arith.truncf %13 : vector<128x32xf32> to vector<128x32xbf16>
    %c0_11 = arith.constant 0 : index
    %c0_12 = arith.constant 0 : index
    %15 = vector.load %arg7[%c0_11, %c0_12] : memref<32x32xbf16, #tpu.memory_space<vmem>>, vector<32x32xbf16>
    %cst_13 = arith.constant dense<0.000000e+00> : vector<128x32xf32>
    %16 = tpu.matmul %14, %15, %cst_13 {dimension_numbers = #tpu.dot_dimension_numbers<[1], [0], [0], [1], [0, 0, 1, 1], [], []>} : vector<128x32xbf16>, vector<32x32xbf16>, vector<128x32xf32> -> vector<128x32xf32>
    %c0_14 = arith.constant 0 : index
    %c0_15 = arith.constant 0 : index
    %17 = vector.load %arg8[%c0_14, %c0_15] : memref<1x32xf32, #tpu.memory_space<vmem>>, vector<1x32xf32>
    %18 = vector.broadcast %17 : vector<1x32xf32> to vector<128x32xf32>
    %19 = arith.addf %16, %18 : vector<128x32xf32>
    %cst_16 = arith.constant 0.000000e+00 : f32
    %20 = vector.broadcast %cst_16 : f32 to vector<128x32xf32>
    %21 = arith.maximumf %19, %20 : vector<128x32xf32>
    %22 = arith.truncf %21 : vector<128x32xf32> to vector<128x32xbf16>
    %c0_17 = arith.constant 0 : index
    %c0_18 = arith.constant 0 : index
    %23 = vector.load %arg9[%c0_17, %c0_18] : memref<32x16xbf16, #tpu.memory_space<vmem>>, vector<32x16xbf16>
    %cst_19 = arith.constant dense<0.000000e+00> : vector<128x16xf32>
    %24 = tpu.matmul %22, %23, %cst_19 {dimension_numbers = #tpu.dot_dimension_numbers<[1], [0], [0], [1], [0, 0, 1, 1], [], []>} : vector<128x32xbf16>, vector<32x16xbf16>, vector<128x16xf32> -> vector<128x16xf32>
    %c0_20 = arith.constant 0 : index
    %c0_21 = arith.constant 0 : index
    %25 = vector.load %arg10[%c0_20, %c0_21] : memref<1x16xf32, #tpu.memory_space<vmem>>, vector<1x16xf32>
    %26 = vector.broadcast %25 : vector<1x16xf32> to vector<128x16xf32>
    %27 = arith.addf %24, %26 : vector<128x16xf32>
    %c0_22 = arith.constant 0 : index
    %c0_23 = arith.constant 0 : index
    %28 = vector.load %arg11[%c0_22, %c0_23] : memref<32x16xbf16, #tpu.memory_space<vmem>>, vector<32x16xbf16>
    %cst_24 = arith.constant dense<0.000000e+00> : vector<128x16xf32>
    %29 = tpu.matmul %22, %28, %cst_24 {dimension_numbers = #tpu.dot_dimension_numbers<[1], [0], [0], [1], [0, 0, 1, 1], [], []>} : vector<128x32xbf16>, vector<32x16xbf16>, vector<128x16xf32> -> vector<128x16xf32>
    %c0_25 = arith.constant 0 : index
    %c0_26 = arith.constant 0 : index
    %30 = vector.load %arg12[%c0_25, %c0_26] : memref<1x16xf32, #tpu.memory_space<vmem>>, vector<1x16xf32>
    %31 = vector.broadcast %30 : vector<1x16xf32> to vector<128x16xf32>
    %32 = arith.addf %29, %31 : vector<128x16xf32>
    %cst_27 = arith.constant 5.000000e-01 : f32
    %33 = vector.broadcast %cst_27 : f32 to vector<128x16xf32>
    %34 = arith.mulf %33, %32 : vector<128x16xf32>
    %35 = math.exp %34 : vector<128x16xf32>
    %c0_28 = arith.constant 0 : index
    %c0_29 = arith.constant 0 : index
    %36 = vector.load %arg3[%c0_28, %c0_29] : memref<128x16xf32, #tpu.memory_space<vmem>>, vector<128x16xf32>
    %37 = arith.mulf %35, %36 : vector<128x16xf32>
    %38 = arith.addf %27, %37 : vector<128x16xf32>
    %39 = arith.truncf %38 : vector<128x16xf32> to vector<128x16xbf16>
    %c0_30 = arith.constant 0 : index
    %c0_31 = arith.constant 0 : index
    %40 = vector.load %arg13[%c0_30, %c0_31] : memref<16x32xbf16, #tpu.memory_space<vmem>>, vector<16x32xbf16>
    %cst_32 = arith.constant dense<0.000000e+00> : vector<128x32xf32>
    %41 = tpu.matmul %39, %40, %cst_32 {dimension_numbers = #tpu.dot_dimension_numbers<[1], [0], [0], [1], [0, 0, 1, 1], [], []>} : vector<128x16xbf16>, vector<16x32xbf16>, vector<128x32xf32> -> vector<128x32xf32>
    %c0_33 = arith.constant 0 : index
    %c0_34 = arith.constant 0 : index
    %42 = vector.load %arg14[%c0_33, %c0_34] : memref<1x32xf32, #tpu.memory_space<vmem>>, vector<1x32xf32>
    %43 = vector.broadcast %42 : vector<1x32xf32> to vector<128x32xf32>
    %44 = arith.addf %41, %43 : vector<128x32xf32>
    %cst_35 = arith.constant 0.000000e+00 : f32
    %45 = vector.broadcast %cst_35 : f32 to vector<128x32xf32>
    %46 = arith.maximumf %44, %45 : vector<128x32xf32>
    %47 = arith.truncf %46 : vector<128x32xf32> to vector<128x32xbf16>
    %c0_36 = arith.constant 0 : index
    %c0_37 = arith.constant 0 : index
    %48 = vector.load %arg15[%c0_36, %c0_37] : memref<32x16xbf16, #tpu.memory_space<vmem>>, vector<32x16xbf16>
    %cst_38 = arith.constant dense<0.000000e+00> : vector<128x16xf32>
    %49 = tpu.matmul %47, %48, %cst_38 {dimension_numbers = #tpu.dot_dimension_numbers<[1], [0], [0], [1], [0, 0, 1, 1], [], []>} : vector<128x32xbf16>, vector<32x16xbf16>, vector<128x16xf32> -> vector<128x16xf32>
    %c0_39 = arith.constant 0 : index
    %c0_40 = arith.constant 0 : index
    %50 = vector.load %arg16[%c0_39, %c0_40] : memref<1x16xf32, #tpu.memory_space<vmem>>, vector<1x16xf32>
    %51 = vector.broadcast %50 : vector<1x16xf32> to vector<128x16xf32>
    %52 = arith.addf %49, %51 : vector<128x16xf32>
    %cst_41 = arith.constant 0.000000e+00 : f32
    %53 = vector.broadcast %cst_41 : f32 to vector<128x16xf32>
    %54 = arith.subf %53, %52 : vector<128x16xf32>
    %55 = math.exp %54 : vector<128x16xf32>
    %cst_42 = arith.constant 1.000000e+00 : f32
    %56 = vector.broadcast %cst_42 : f32 to vector<128x16xf32>
    %57 = arith.addf %56, %55 : vector<128x16xf32>
    %cst_43 = arith.constant 1.000000e+00 : f32
    %58 = vector.broadcast %cst_43 : f32 to vector<128x16xf32>
    %59 = arith.divf %58, %57 : vector<128x16xf32>
    %c0_44 = arith.constant 0 : index
    %c0_45 = arith.constant 0 : index
    %60 = vector.load %arg17[%c0_44, %c0_45] : memref<128x16xf32, #tpu.memory_space<vmem>>, vector<128x16xf32>
    tpu.vector_store %arg17[%c0_44, %c0_45], %59 {strides = array<i32>} : memref<128x16xf32, #tpu.memory_space<vmem>>, vector<128x16xf32>,
    %cst_46 = arith.constant 1.000000e+00 : f32
    %61 = vector.broadcast %cst_46 : f32 to vector<128x16xf32>
    %62 = arith.addf %61, %32 : vector<128x16xf32>
    %63 = arith.mulf %27, %27 : vector<128x16xf32>
    %64 = arith.subf %62, %63 : vector<128x16xf32>
    %65 = arith.mulf %35, %35 : vector<128x16xf32>
    %66 = arith.subf %64, %65 : vector<128x16xf32>
    %cst_47 = arith.constant dense<0.000000e+00> : vector<128xf32>
    %67 = vector.multi_reduction <add>, %66, %cst_47 [1] : vector<128x16xf32> to vector<128xf32>
    %68 = vector.shape_cast %67 : vector<128xf32> to vector<128x1xf32>
    %cst_48 = arith.constant -5.000000e-01 : f32
    %69 = vector.broadcast %cst_48 : f32 to vector<128x1xf32>
    %70 = arith.mulf %69, %68 : vector<128x1xf32>
    %c0_49 = arith.constant 0 : index
    %c0_50 = arith.constant 0 : index
    %71 = vector.load %arg18[%c0_49, %c0_50] : memref<128x1xf32, #tpu.memory_space<vmem>>, vector<128x1xf32>
    tpu.vector_store %arg18[%c0_49, %c0_50], %70 {strides = array<i32>} : memref<128x1xf32, #tpu.memory_space<vmem>>, vector<128x1xf32>,
    return
  }
  func.func @transform_0(%arg0: i32) -> (i32, i32) {
    %c0_i32 = arith.constant 0 : i32
    %c0_i32_0 = arith.constant 0 : i32
    return %arg0, %c0_i32 : i32, i32
  }
  func.func @transform_1(%arg0: i32) -> (i32, i32) {
    %c0_i32 = arith.constant 0 : i32
    %c0_i32_0 = arith.constant 0 : i32
    return %arg0, %c0_i32 : i32, i32
  }
  func.func @transform_2(%arg0: i32) -> (i32, i32) {
    %c0_i32 = arith.constant 0 : i32
    %c0_i32_0 = arith.constant 0 : i32
    return %arg0, %c0_i32 : i32, i32
  }
  func.func @transform_3(%arg0: i32) -> (i32, i32) {
    %c0_i32 = arith.constant 0 : i32
    %c0_i32_0 = arith.constant 0 : i32
    %c0_i32_1 = arith.constant 0 : i32
    return %c0_i32, %c0_i32_0 : i32, i32
  }
  func.func @transform_4(%arg0: i32) -> (i32, i32) {
    %c0_i32 = arith.constant 0 : i32
    %c0_i32_0 = arith.constant 0 : i32
    %c0_i32_1 = arith.constant 0 : i32
    return %c0_i32, %c0_i32_0 : i32, i32
  }
  func.func @transform_5(%arg0: i32) -> (i32, i32) {
    %c0_i32 = arith.constant 0 : i32
    %c0_i32_0 = arith.constant 0 : i32
    %c0_i32_1 = arith.constant 0 : i32
    return %c0_i32, %c0_i32_0 : i32, i32
  }
  func.func @transform_6(%arg0: i32) -> (i32, i32) {
    %c0_i32 = arith.constant 0 : i32
    %c0_i32_0 = arith.constant 0 : i32
    %c0_i32_1 = arith.constant 0 : i32
    return %c0_i32, %c0_i32_0 : i32, i32
  }
  func.func @transform_7(%arg0: i32) -> (i32, i32) {
    %c0_i32 = arith.constant 0 : i32
    %c0_i32_0 = arith.constant 0 : i32
    %c0_i32_1 = arith.constant 0 : i32
    return %c0_i32, %c0_i32_0 : i32, i32
  }
  func.func @transform_8(%arg0: i32) -> (i32, i32) {
    %c0_i32 = arith.constant 0 : i32
    %c0_i32_0 = arith.constant 0 : i32
    %c0_i32_1 = arith.constant 0 : i32
    return %c0_i32, %c0_i32_0 : i32, i32
  }
  func.func @transform_9(%arg0: i32) -> (i32, i32) {
    %c0_i32 = arith.constant 0 : i32
    %c0_i32_0 = arith.constant 0 : i32
    %c0_i32_1 = arith.constant 0 : i32
    return %c0_i32, %c0_i32_0 : i32, i32
  }
  func.func @transform_10(%arg0: i32) -> (i32, i32) {
    %c0_i32 = arith.constant 0 : i32
    %c0_i32_0 = arith.constant 0 : i32
    %c0_i32_1 = arith.constant 0 : i32
    return %c0_i32, %c0_i32_0 : i32, i32
  }
  func.func @transform_11(%arg0: i32) -> (i32, i32) {
    %c0_i32 = arith.constant 0 : i32
    %c0_i32_0 = arith.constant 0 : i32
    %c0_i32_1 = arith.constant 0 : i32
    return %c0_i32, %c0_i32_0 : i32, i32
  }
  func.func @transform_12(%arg0: i32) -> (i32, i32) {
    %c0_i32 = arith.constant 0 : i32
    %c0_i32_0 = arith.constant 0 : i32
    %c0_i32_1 = arith.constant 0 : i32
    return %c0_i32, %c0_i32_0 : i32, i32
  }
  func.func @transform_13(%arg0: i32) -> (i32, i32) {
    %c0_i32 = arith.constant 0 : i32
    %c0_i32_0 = arith.constant 0 : i32
    %c0_i32_1 = arith.constant 0 : i32
    return %c0_i32, %c0_i32_0 : i32, i32
  }
  func.func @transform_14(%arg0: i32) -> (i32, i32) {
    %c0_i32 = arith.constant 0 : i32
    %c0_i32_0 = arith.constant 0 : i32
    %c0_i32_1 = arith.constant 0 : i32
    return %c0_i32, %c0_i32_0 : i32, i32
  }
  func.func @transform_15(%arg0: i32) -> (i32, i32) {
    %c0_i32 = arith.constant 0 : i32
    %c0_i32_0 = arith.constant 0 : i32
    %c0_i32_1 = arith.constant 0 : i32
    return %c0_i32, %c0_i32_0 : i32, i32
  }
  func.func @transform_16(%arg0: i32) -> (i32, i32) {
    %c0_i32 = arith.constant 0 : i32
    %c0_i32_0 = arith.constant 0 : i32
    return %arg0, %c0_i32 : i32, i32
  }
  func.func @transform_17(%arg0: i32) -> (i32, i32) {
    %c0_i32 = arith.constant 0 : i32
    %c0_i32_0 = arith.constant 0 : i32
    return %arg0, %c0_i32 : i32, i32
  }
}

</mosaic_0001>

<llo_original>
// kernel: tpu_custom_call.1
$region0: #{tpu_custom_call.1}
  #allocation0 [shape = 'u32[]', space=smem, size = 0x4, offset = 0x4, fixed_abs, tag = 'smem constant byte address 0x4 - core index']
  #allocation1 [shape = 'u32[144,128]{1,0:T(1,128)}', space=vmem, size = 0x12000, scoped, tag = 'internal scratch']
  %s0 = inlined_call_operand.vmem [shape: f32[256,16], index: 0, kind: input, shape index: {}]
  %s1 = inlined_call_operand.vmem [shape: f32[256,8], index: 1, kind: input, shape index: {}]
  %s2 = inlined_call_operand.vmem [shape: f32[256,16], index: 2, kind: input, shape index: {}]
  %s3 = inlined_call_operand.vmem [shape: bf16[16,32], index: 3, kind: input, shape index: {}]
  %s4 = inlined_call_operand.vmem [shape: bf16[8,32], index: 4, kind: input, shape index: {}]
  %s5 = inlined_call_operand.vmem [shape: f32[1,32], index: 5, kind: input, shape index: {}]
  %s6 = inlined_call_operand.vmem [shape: bf16[32,32], index: 6, kind: input, shape index: {}]
  %s7 = inlined_call_operand.vmem [shape: f32[1,32], index: 7, kind: input, shape index: {}]
  %s8 = inlined_call_operand.vmem [shape: bf16[32,16], index: 8, kind: input, shape index: {}]
  %s9 = inlined_call_operand.vmem [shape: f32[1,16], index: 9, kind: input, shape index: {}]
  %s10 = inlined_call_operand.vmem [shape: bf16[32,16], index: 10, kind: input, shape index: {}]
  %s11 = inlined_call_operand.vmem [shape: f32[1,16], index: 11, kind: input, shape index: {}]
  %s12 = inlined_call_operand.vmem [shape: bf16[16,32], index: 12, kind: input, shape index: {}]
  %s13 = inlined_call_operand.vmem [shape: f32[1,32], index: 13, kind: input, shape index: {}]
  %s14 = inlined_call_operand.vmem [shape: bf16[32,16], index: 14, kind: input, shape index: {}]
  %s15 = inlined_call_operand.vmem [shape: f32[1,16], index: 15, kind: input, shape index: {}]
  %s16 = inlined_call_operand.vmem [shape: f32[256,16], index: 16, kind: output, shape index: {0}]
  %s17 = inlined_call_operand.vmem [shape: f32[256,1], index: 17, kind: output, shape index: {1}]
  %18 = xla_tuple %s16, %s17
  %s19 = sld [smem:[#allocation0]]
  $region105: #{tpu_custom_call.1} parent=0
    _
  %s21 = ssub.s32 1, %s19
  %s22 = scalar_select 0, %s21, %s19
  loop: start=0, step=1, limit=4
  $region2: #{tpu_custom_call.1} parent=0 // loop_pre_header
    _
  $region3: #{tpu_custom_call.1} parent=0 // loop_header
    %s24 = sphi 0, %s28
    %p25 = scmp.ge.s32.totalorder %s24, 4
    %s34 = sphi 0, %s36
    %s37 = sphi 0, %s34
    %s38 = sphi 0, %s37
    %s54 = sphi 0, %s38
    %s60 = sphi 0, %s62
    %s63 = sphi 0, %s60
    %s64 = sphi 0, %s63
    %s80 = sphi 0, %s64
    %s86 = sphi 0, %s88
    %s89 = sphi 0, %s86
    %s90 = sphi 0, %s89
    %s106 = sphi 0, %s90
    %s110 = sphi 0, %s110
    %s112 = sphi 0, %s110
    %s113 = sphi 0, %s112
    %s127 = sphi 0, %s113
    %s131 = sphi 0, %s131
    %s133 = sphi 0, %s131
    %s134 = sphi 0, %s133
    %s148 = sphi 0, %s134
    %s152 = sphi 0, %s152
    %s154 = sphi 0, %s152
    %s155 = sphi 0, %s154
    %s169 = sphi 0, %s155
    %s173 = sphi 0, %s173
    %s175 = sphi 0, %s173
    %s176 = sphi 0, %s175
    %s190 = sphi 0, %s176
    %s194 = sphi 0, %s194
    %s196 = sphi 0, %s194
    %s197 = sphi 0, %s196
    %s211 = sphi 0, %s197
    %s215 = sphi 0, %s215
    %s217 = sphi 0, %s215
    %s218 = sphi 0, %s217
    %s232 = sphi 0, %s218
    %s236 = sphi 0, %s236
    %s238 = sphi 0, %s236
    %s239 = sphi 0, %s238
    %s253 = sphi 0, %s239
    %s257 = sphi 0, %s257
    %s259 = sphi 0, %s257
    %s260 = sphi 0, %s259
    %s274 = sphi 0, %s260
    %s278 = sphi 0, %s278
    %s280 = sphi 0, %s278
    %s281 = sphi 0, %s280
    %s295 = sphi 0, %s281
    %s299 = sphi 0, %s299
    %s301 = sphi 0, %s299
    %s302 = sphi 0, %s301
    %s316 = sphi 0, %s302
    %s320 = sphi 0, %s320
    %s322 = sphi 0, %s320
    %s323 = sphi 0, %s322
    %s337 = sphi 0, %s323
    %s341 = sphi 0, %s341
    %s343 = sphi 0, %s341
    %s344 = sphi 0, %s343
    %s358 = sphi 0, %s344
    %s362 = sphi 0, %s362
    %s364 = sphi 0, %s362
    %s365 = sphi 0, %s364
    %s379 = sphi 0, %s365
    %s385 = sphi 0, %s387
    %s388 = sphi 0, %s385
    %s389 = sphi 0, %s388
    %s405 = sphi 0, %s389
    %s411 = sphi 0, %s413
    %s414 = sphi 0, %s411
    %s415 = sphi 0, %s414
    %s431 = sphi 0, %s415
  $region4: #{tpu_custom_call.1} parent=0 // loop_header_branch
    %27 = sbr.rel (%p25) target = $region8
  $region5: #{tpu_custom_call.1} parent=0 // loop_body
    %s29 = ssub.s32 %s24, 1
    %s30 = ssub.s32 %s24, 2
    %s31 = sadd.s32 %s24, 1
    %s32 = ssub.s32 %s24, %s31
    %p33 = scmp.eq.s32.totalorder %s32, 0
    %s35 = sadd.s32 %s34, 1
    %s36 = scalar_select %p33, %s34, %s35
    %p39 = pneg %p33
    %p40 = scmp.eq.s32.totalorder %s24, 1
    %p41 = por %p39, %p40
    %p42 = scmp.ne.s32.totalorder %s34, %s37
    %p43 = scmp.eq.s32.totalorder %s24, 0
    %p44 = por %p42, %p43
    %p45 = scmp.ne.s32.totalorder %s34, %s37
    %p46 = scmp.eq.s32.totalorder %s29, 1
    %p47 = por %p45, %p46
    %p48 = scmp.ne.s32.totalorder %s37, %s38
    %p49 = scmp.eq.s32.totalorder %s29, 0
    %p50 = por %p48, %p49
    %p51 = scmp.ne.s32.totalorder %s37, %s38
    %p52 = scmp.eq.s32.totalorder %s30, 1
    %p53 = por %p51, %p52
    %p55 = scmp.ne.s32.totalorder %s38, %s54
    %p56 = scmp.eq.s32.totalorder %s30, 0
    %p57 = por %p55, %p56
    %s58 = ssub.s32 %s24, %s31
    %p59 = scmp.eq.s32.totalorder %s58, 0
    %s61 = sadd.s32 %s60, 1
    %s62 = scalar_select %p59, %s60, %s61
    %p65 = pneg %p59
    %p66 = scmp.eq.s32.totalorder %s24, 1
    %p67 = por %p65, %p66
    %p68 = scmp.ne.s32.totalorder %s60, %s63
    %p69 = scmp.eq.s32.totalorder %s24, 0
    %p70 = por %p68, %p69
    %p71 = scmp.ne.s32.totalorder %s60, %s63
    %p72 = scmp.eq.s32.totalorder %s29, 1
    %p73 = por %p71, %p72
    %p74 = scmp.ne.s32.totalorder %s63, %s64
    %p75 = scmp.eq.s32.totalorder %s29, 0
    %p76 = por %p74, %p75
    %p77 = scmp.ne.s32.totalorder %s63, %s64
    %p78 = scmp.eq.s32.totalorder %s30, 1
    %p79 = por %p77, %p78
    %p81 = scmp.ne.s32.totalorder %s64, %s80
    %p82 = scmp.eq.s32.totalorder %s30, 0
    %p83 = por %p81, %p82
    %s84 = ssub.s32 %s24, %s31
    %p85 = scmp.eq.s32.totalorder %s84, 0
    %s87 = sadd.s32 %s86, 1
    %s88 = scalar_select %p85, %s86, %s87
    %p91 = pneg %p85
    %p92 = scmp.eq.s32.totalorder %s24, 1
    %p93 = por %p91, %p92
    %p94 = scmp.ne.s32.totalorder %s86, %s89
    %p95 = scmp.eq.s32.totalorder %s24, 0
    %p96 = por %p94, %p95
    %p97 = scmp.ne.s32.totalorder %s86, %s89
    %p98 = scmp.eq.s32.totalorder %s29, 1
    %p99 = por %p97, %p98
    %p100 = scmp.ne.s32.totalorder %s89, %s90
    %p101 = scmp.eq.s32.totalorder %s29, 0
    %p102 = por %p100, %p101
    %p103 = scmp.ne.s32.totalorder %s89, %s90
    %p104 = scmp.eq.s32.totalorder %s30, 1
    %p105 = por %p103, %p104
    %p107 = scmp.ne.s32.totalorder %s90, %s106
    %p108 = scmp.eq.s32.totalorder %s30, 0
    %p109 = por %p107, %p108
    %s111 = sadd.s32 %s110, 1
    %p114 = scmp.eq.s32.totalorder %s24, 1
    %p115 = scmp.ne.s32.totalorder %s110, %s112
    %p116 = scmp.eq.s32.totalorder %s24, 0
    %p117 = por %p115, %p116
    %p118 = scmp.ne.s32.totalorder %s110, %s112
    %p119 = scmp.eq.s32.totalorder %s29, 1
    %p120 = por %p118, %p119
    %p121 = scmp.ne.s32.totalorder %s112, %s113
    %p122 = scmp.eq.s32.totalorder %s29, 0
    %p123 = por %p121, %p122
    %p124 = scmp.ne.s32.totalorder %s112, %s113
    %p125 = scmp.eq.s32.totalorder %s30, 1
    %p126 = por %p124, %p125
    %p128 = scmp.ne.s32.totalorder %s113, %s127
    %p129 = scmp.eq.s32.totalorder %s30, 0
    %p130 = por %p128, %p129
    %s132 = sadd.s32 %s131, 1
    %p135 = scmp.eq.s32.totalorder %s24, 1
    %p136 = scmp.ne.s32.totalorder %s131, %s133
    %p137 = scmp.eq.s32.totalorder %s24, 0
    %p138 = por %p136, %p137
    %p139 = scmp.ne.s32.totalorder %s131, %s133
    %p140 = scmp.eq.s32.totalorder %s29, 1
    %p141 = por %p139, %p140
    %p142 = scmp.ne.s32.totalorder %s133, %s134
    %p143 = scmp.eq.s32.totalorder %s29, 0
    %p144 = por %p142, %p143
    %p145 = scmp.ne.s32.totalorder %s133, %s134
    %p146 = scmp.eq.s32.totalorder %s30, 1
    %p147 = por %p145, %p146
    %p149 = scmp.ne.s32.totalorder %s134, %s148
    %p150 = scmp.eq.s32.totalorder %s30, 0
    %p151 = por %p149, %p150
    %s153 = sadd.s32 %s152, 1
    %p156 = scmp.eq.s32.totalorder %s24, 1
    %p157 = scmp.ne.s32.totalorder %s152, %s154
    %p158 = scmp.eq.s32.totalorder %s24, 0
    %p159 = por %p157, %p158
    %p160 = scmp.ne.s32.totalorder %s152, %s154
    %p161 = scmp.eq.s32.totalorder %s29, 1
    %p162 = por %p160, %p161
    %p163 = scmp.ne.s32.totalorder %s154, %s155
    %p164 = scmp.eq.s32.totalorder %s29, 0
    %p165 = por %p163, %p164
    %p166 = scmp.ne.s32.totalorder %s154, %s155
    %p167 = scmp.eq.s32.totalorder %s30, 1
    %p168 = por %p166, %p167
    %p170 = scmp.ne.s32.totalorder %s155, %s169
    %p171 = scmp.eq.s32.totalorder %s30, 0
    %p172 = por %p170, %p171
    %s174 = sadd.s32 %s173, 1
    %p177 = scmp.eq.s32.totalorder %s24, 1
    %p178 = scmp.ne.s32.totalorder %s173, %s175
    %p179 = scmp.eq.s32.totalorder %s24, 0
    %p180 = por %p178, %p179
    %p181 = scmp.ne.s32.totalorder %s173, %s175
    %p182 = scmp.eq.s32.totalorder %s29, 1
    %p183 = por %p181, %p182
    %p184 = scmp.ne.s32.totalorder %s175, %s176
    %p185 = scmp.eq.s32.totalorder %s29, 0
    %p186 = por %p184, %p185
    %p187 = scmp.ne.s32.totalorder %s175, %s176
    %p188 = scmp.eq.s32.totalorder %s30, 1
    %p189 = por %p187, %p188
    %p191 = scmp.ne.s32.totalorder %s176, %s190
    %p192 = scmp.eq.s32.totalorder %s30, 0
    %p193 = por %p191, %p192
    %s195 = sadd.s32 %s194, 1
    %p198 = scmp.eq.s32.totalorder %s24, 1
    %p199 = scmp.ne.s32.totalorder %s194, %s196
    %p200 = scmp.eq.s32.totalorder %s24, 0
    %p201 = por %p199, %p200
    %p202 = scmp.ne.s32.totalorder %s194, %s196
    %p203 = scmp.eq.s32.totalorder %s29, 1
    %p204 = por %p202, %p203
    %p205 = scmp.ne.s32.totalorder %s196, %s197
    %p206 = scmp.eq.s32.totalorder %s29, 0
    %p207 = por %p205, %p206
    %p208 = scmp.ne.s32.totalorder %s196, %s197
    %p209 = scmp.eq.s32.totalorder %s30, 1
    %p210 = por %p208, %p209
    %p212 = scmp.ne.s32.totalorder %s197, %s211
    %p213 = scmp.eq.s32.totalorder %s30, 0
    %p214 = por %p212, %p213
    %s216 = sadd.s32 %s215, 1
    %p219 = scmp.eq.s32.totalorder %s24, 1
    %p220 = scmp.ne.s32.totalorder %s215, %s217
    %p221 = scmp.eq.s32.totalorder %s24, 0
    %p222 = por %p220, %p221
    %p223 = scmp.ne.s32.totalorder %s215, %s217
    %p224 = scmp.eq.s32.totalorder %s29, 1
    %p225 = por %p223, %p224
    %p226 = scmp.ne.s32.totalorder %s217, %s218
    %p227 = scmp.eq.s32.totalorder %s29, 0
    %p228 = por %p226, %p227
    %p229 = scmp.ne.s32.totalorder %s217, %s218
    %p230 = scmp.eq.s32.totalorder %s30, 1
    %p231 = por %p229, %p230
    %p233 = scmp.ne.s32.totalorder %s218, %s232
    %p234 = scmp.eq.s32.totalorder %s30, 0
    %p235 = por %p233, %p234
    %s237 = sadd.s32 %s236, 1
    %p240 = scmp.eq.s32.totalorder %s24, 1
    %p241 = scmp.ne.s32.totalorder %s236, %s238
    %p242 = scmp.eq.s32.totalorder %s24, 0
    %p243 = por %p241, %p242
    %p244 = scmp.ne.s32.totalorder %s236, %s238
    %p245 = scmp.eq.s32.totalorder %s29, 1
    %p246 = por %p244, %p245
    %p247 = scmp.ne.s32.totalorder %s238, %s239
    %p248 = scmp.eq.s32.totalorder %s29, 0
    %p249 = por %p247, %p248
    %p250 = scmp.ne.s32.totalorder %s238, %s239
    %p251 = scmp.eq.s32.totalorder %s30, 1
    %p252 = por %p250, %p251
    %p254 = scmp.ne.s32.totalorder %s239, %s253
    %p255 = scmp.eq.s32.totalorder %s30, 0
    %p256 = por %p254, %p255
    %s258 = sadd.s32 %s257, 1
    %p261 = scmp.eq.s32.totalorder %s24, 1
    %p262 = scmp.ne.s32.totalorder %s257, %s259
    %p263 = scmp.eq.s32.totalorder %s24, 0
    %p264 = por %p262, %p263
    %p265 = scmp.ne.s32.totalorder %s257, %s259
    %p266 = scmp.eq.s32.totalorder %s29, 1
    %p267 = por %p265, %p266
    %p268 = scmp.ne.s32.totalorder %s259, %s260
    %p269 = scmp.eq.s32.totalorder %s29, 0
    %p270 = por %p268, %p269
    %p271 = scmp.ne.s32.totalorder %s259, %s260
    %p272 = scmp.eq.s32.totalorder %s30, 1
    %p273 = por %p271, %p272
    %p275 = scmp.ne.s32.totalorder %s260, %s274
    %p276 = scmp.eq.s32.totalorder %s30, 0
    %p277 = por %p275, %p276
    %s279 = sadd.s32 %s278, 1
    %p282 = scmp.eq.s32.totalorder %s24, 1
    %p283 = scmp.ne.s32.totalorder %s278, %s280
    %p284 = scmp.eq.s32.totalorder %s24, 0
    %p285 = por %p283, %p284
    %p286 = scmp.ne.s32.totalorder %s278, %s280
    %p287 = scmp.eq.s32.totalorder %s29, 1
    %p288 = por %p286, %p287
    %p289 = scmp.ne.s32.totalorder %s280, %s281
    %p290 = scmp.eq.s32.totalorder %s29, 0
    %p291 = por %p289, %p290
    %p292 = scmp.ne.s32.totalorder %s280, %s281
    %p293 = scmp.eq.s32.totalorder %s30, 1
    %p294 = por %p292, %p293
    %p296 = scmp.ne.s32.totalorder %s281, %s295
    %p297 = scmp.eq.s32.totalorder %s30, 0
    %p298 = por %p296, %p297
    %s300 = sadd.s32 %s299, 1
    %p303 = scmp.eq.s32.totalorder %s24, 1
    %p304 = scmp.ne.s32.totalorder %s299, %s301
    %p305 = scmp.eq.s32.totalorder %s24, 0
    %p306 = por %p304, %p305
    %p307 = scmp.ne.s32.totalorder %s299, %s301
    %p308 = scmp.eq.s32.totalorder %s29, 1
    %p309 = por %p307, %p308
    %p310 = scmp.ne.s32.totalorder %s301, %s302
    %p311 = scmp.eq.s32.totalorder %s29, 0
    %p312 = por %p310, %p311
    %p313 = scmp.ne.s32.totalorder %s301, %s302
    %p314 = scmp.eq.s32.totalorder %s30, 1
    %p315 = por %p313, %p314
    %p317 = scmp.ne.s32.totalorder %s302, %s316
    %p318 = scmp.eq.s32.totalorder %s30, 0
    %p319 = por %p317, %p318
    %s321 = sadd.s32 %s320, 1
    %p324 = scmp.eq.s32.totalorder %s24, 1
    %p325 = scmp.ne.s32.totalorder %s320, %s322
    %p326 = scmp.eq.s32.totalorder %s24, 0
    %p327 = por %p325, %p326
    %p328 = scmp.ne.s32.totalorder %s320, %s322
    %p329 = scmp.eq.s32.totalorder %s29, 1
    %p330 = por %p328, %p329
    %p331 = scmp.ne.s32.totalorder %s322, %s323
    %p332 = scmp.eq.s32.totalorder %s29, 0
    %p333 = por %p331, %p332
    %p334 = scmp.ne.s32.totalorder %s322, %s323
    %p335 = scmp.eq.s32.totalorder %s30, 1
    %p336 = por %p334, %p335
    %p338 = scmp.ne.s32.totalorder %s323, %s337
    %p339 = scmp.eq.s32.totalorder %s30, 0
    %p340 = por %p338, %p339
    %s342 = sadd.s32 %s341, 1
    %p345 = scmp.eq.s32.totalorder %s24, 1
    %p346 = scmp.ne.s32.totalorder %s341, %s343
    %p347 = scmp.eq.s32.totalorder %s24, 0
    %p348 = por %p346, %p347
    %p349 = scmp.ne.s32.totalorder %s341, %s343
    %p350 = scmp.eq.s32.totalorder %s29, 1
    %p351 = por %p349, %p350
    %p352 = scmp.ne.s32.totalorder %s343, %s344
    %p353 = scmp.eq.s32.totalorder %s29, 0
    %p354 = por %p352, %p353
    %p355 = scmp.ne.s32.totalorder %s343, %s344
    %p356 = scmp.eq.s32.totalorder %s30, 1
    %p357 = por %p355, %p356
    %p359 = scmp.ne.s32.totalorder %s344, %s358
    %p360 = scmp.eq.s32.totalorder %s30, 0
    %p361 = por %p359, %p360
    %s363 = sadd.s32 %s362, 1
    %p366 = scmp.eq.s32.totalorder %s24, 1
    %p367 = scmp.ne.s32.totalorder %s362, %s364
    %p368 = scmp.eq.s32.totalorder %s24, 0
    %p369 = por %p367, %p368
    %p370 = scmp.ne.s32.totalorder %s362, %s364
    %p371 = scmp.eq.s32.totalorder %s29, 1
    %p372 = por %p370, %p371
    %p373 = scmp.ne.s32.totalorder %s364, %s365
    %p374 = scmp.eq.s32.totalorder %s29, 0
    %p375 = por %p373, %p374
    %p376 = scmp.ne.s32.totalorder %s364, %s365
    %p377 = scmp.eq.s32.totalorder %s30, 1
    %p378 = por %p376, %p377
    %p380 = scmp.ne.s32.totalorder %s365, %s379
    %p381 = scmp.eq.s32.totalorder %s30, 0
    %p382 = por %p380, %p381
    %s383 = ssub.s32 %s24, %s31
    %p384 = scmp.eq.s32.totalorder %s383, 0
    %s386 = sadd.s32 %s385, 1
    %s387 = scalar_select %p384, %s385, %s386
    %p390 = pneg %p384
    %p391 = scmp.eq.s32.totalorder %s24, 1
    %p392 = por %p390, %p391
    %p393 = scmp.ne.s32.totalorder %s385, %s388
    %p394 = scmp.eq.s32.totalorder %s24, 0
    %p395 = por %p393, %p394
    %p396 = scmp.ne.s32.totalorder %s385, %s388
    %p397 = scmp.eq.s32.totalorder %s29, 1
    %p398 = por %p396, %p397
    %p399 = scmp.ne.s32.totalorder %s388, %s389
    %p400 = scmp.eq.s32.totalorder %s29, 0
    %p401 = por %p399, %p400
    %p402 = scmp.ne.s32.totalorder %s388, %s389
    %p403 = scmp.eq.s32.totalorder %s30, 1
    %p404 = por %p402, %p403
    %p406 = scmp.ne.s32.totalorder %s389, %s405
    %p407 = scmp.eq.s32.totalorder %s30, 0
    %p408 = por %p406, %p407
    %s409 = ssub.s32 %s24, %s31
    %p410 = scmp.eq.s32.totalorder %s409, 0
    %s412 = sadd.s32 %s411, 1
    %s413 = scalar_select %p410, %s411, %s412
    %p416 = pneg %p410
    %p417 = scmp.eq.s32.totalorder %s24, 1
    %p418 = por %p416, %p417
    %p419 = scmp.ne.s32.totalorder %s411, %s414
    %p420 = scmp.eq.s32.totalorder %s24, 0
    %p421 = por %p419, %p420
    %p422 = scmp.ne.s32.totalorder %s411, %s414
    %p423 = scmp.eq.s32.totalorder %s29, 1
    %p424 = por %p422, %p423
    %p425 = scmp.ne.s32.totalorder %s414, %s415
    %p426 = scmp.eq.s32.totalorder %s29, 0
    %p427 = por %p425, %p426
    %p428 = scmp.ne.s32.totalorder %s414, %s415
    %p429 = scmp.eq.s32.totalorder %s30, 1
    %p430 = por %p428, %p429
    %p432 = scmp.ne.s32.totalorder %s415, %s431
    %p433 = scmp.eq.s32.totalorder %s30, 0
    %p434 = por %p432, %p433
    %p435 = scmp.le.s32.totalorder 1, %s24
    %p436 = scmp.lt.s32.totalorder %s24, 3
    %p437 = pnand %p435, %p436
    %p438 = pneg %p437
    // Predicated region
    $region9: #{tpu_custom_call.1} parent=5 // pred_check
      _
    $region10: #{tpu_custom_call.1} parent=5 // pred_check_branch
      %440 = sbr.rel (%p437) target = $region12
    $region11: #{tpu_custom_call.1} parent=5 // pred_region
      %s441 = ssub.s32 %s24, 1
      // Predicated region
      $region13: #{tpu_custom_call.1} parent=11 // pred_check
        %p442 = pneg %p123
      $region14: #{tpu_custom_call.1} parent=11 // pred_check_branch
        %444 = sbr.rel (%p442) target = $region16
      $region15: #{tpu_custom_call.1} parent=11 // pred_region
        _
      $region16: #{tpu_custom_call.1} parent=11 // pred_fallthru
        _
      // Predicated region
      $region17: #{tpu_custom_call.1} parent=11 // pred_check
        %p445 = pneg %p144
      $region18: #{tpu_custom_call.1} parent=11 // pred_check_branch
        %447 = sbr.rel (%p445) target = $region20
      $region19: #{tpu_custom_call.1} parent=11 // pred_region
        _
      $region20: #{tpu_custom_call.1} parent=11 // pred_fallthru
        _
      // Predicated region
      $region21: #{tpu_custom_call.1} parent=11 // pred_check
        %p448 = pneg %p165
      $region22: #{tpu_custom_call.1} parent=11 // pred_check_branch
        %450 = sbr.rel (%p448) target = $region24
      $region23: #{tpu_custom_call.1} parent=11 // pred_region
        _
      $region24: #{tpu_custom_call.1} parent=11 // pred_fallthru
        _
      // Predicated region
      $region25: #{tpu_custom_call.1} parent=11 // pred_check
        %p451 = pneg %p186
      $region26: #{tpu_custom_call.1} parent=11 // pred_check_branch
        %453 = sbr.rel (%p451) target = $region28
      $region27: #{tpu_custom_call.1} parent=11 // pred_region
        _
      $region28: #{tpu_custom_call.1} parent=11 // pred_fallthru
        _
      // Predicated region
      $region29: #{tpu_custom_call.1} parent=11 // pred_check
        %p454 = pneg %p207
      $region30: #{tpu_custom_call.1} parent=11 // pred_check_branch
        %456 = sbr.rel (%p454) target = $region32
      $region31: #{tpu_custom_call.1} parent=11 // pred_region
        _
      $region32: #{tpu_custom_call.1} parent=11 // pred_fallthru
        _
      // Predicated region
      $region33: #{tpu_custom_call.1} parent=11 // pred_check
        %p457 = pneg %p228
      $region34: #{tpu_custom_call.1} parent=11 // pred_check_branch
        %459 = sbr.rel (%p457) target = $region36
      $region35: #{tpu_custom_call.1} parent=11 // pred_region
        _
      $region36: #{tpu_custom_call.1} parent=11 // pred_fallthru
        _
      // Predicated region
      $region37: #{tpu_custom_call.1} parent=11 // pred_check
        %p460 = pneg %p249
      $region38: #{tpu_custom_call.1} parent=11 // pred_check_branch
        %462 = sbr.rel (%p460) target = $region40
      $region39: #{tpu_custom_call.1} parent=11 // pred_region
        _
      $region40: #{tpu_custom_call.1} parent=11 // pred_fallthru
        _
      // Predicated region
      $region41: #{tpu_custom_call.1} parent=11 // pred_check
        %p463 = pneg %p270
      $region42: #{tpu_custom_call.1} parent=11 // pred_check_branch
        %465 = sbr.rel (%p463) target = $region44
      $region43: #{tpu_custom_call.1} parent=11 // pred_region
        _
      $region44: #{tpu_custom_call.1} parent=11 // pred_fallthru
        _
      // Predicated region
      $region45: #{tpu_custom_call.1} parent=11 // pred_check
        %p466 = pneg %p291
      $region46: #{tpu_custom_call.1} parent=11 // pred_check_branch
        %468 = sbr.rel (%p466) target = $region48
      $region47: #{tpu_custom_call.1} parent=11 // pred_region
        _
      $region48: #{tpu_custom_call.1} parent=11 // pred_fallthru
        _
      // Predicated region
      $region49: #{tpu_custom_call.1} parent=11 // pred_check
        %p469 = pneg %p312
      $region50: #{tpu_custom_call.1} parent=11 // pred_check_branch
        %471 = sbr.rel (%p469) target = $region52
      $region51: #{tpu_custom_call.1} parent=11 // pred_region
        _
      $region52: #{tpu_custom_call.1} parent=11 // pred_fallthru
        _
      // Predicated region
      $region53: #{tpu_custom_call.1} parent=11 // pred_check
        %p472 = pneg %p333
      $region54: #{tpu_custom_call.1} parent=11 // pred_check_branch
        %474 = sbr.rel (%p472) target = $region56
      $region55: #{tpu_custom_call.1} parent=11 // pred_region
        _
      $region56: #{tpu_custom_call.1} parent=11 // pred_fallthru
        _
      // Predicated region
      $region57: #{tpu_custom_call.1} parent=11 // pred_check
        %p475 = pneg %p354
      $region58: #{tpu_custom_call.1} parent=11 // pred_check_branch
        %477 = sbr.rel (%p475) target = $region60
      $region59: #{tpu_custom_call.1} parent=11 // pred_region
        _
      $region60: #{tpu_custom_call.1} parent=11 // pred_fallthru
        _
      // Predicated region
      $region61: #{tpu_custom_call.1} parent=11 // pred_check
        %p478 = pneg %p375
      $region62: #{tpu_custom_call.1} parent=11 // pred_check_branch
        %480 = sbr.rel (%p478) target = $region64
      $region63: #{tpu_custom_call.1} parent=11 // pred_region
        _
      $region64: #{tpu_custom_call.1} parent=11 // pred_fallthru
        _
    $region12: #{tpu_custom_call.1} parent=5 // pred_fallthru
      _
    %p481 = scmp.lt.s32.totalorder %s24, 2
    // Predicated region
    $region65: #{tpu_custom_call.1} parent=5 // pred_check
      %p482 = pneg %p481
    $region66: #{tpu_custom_call.1} parent=5 // pred_check_branch
      %484 = sbr.rel (%p482) target = $region68
    $region67: #{tpu_custom_call.1} parent=5 // pred_region
      // Predicated region
      $region69: #{tpu_custom_call.1} parent=67 // pred_check
        %p485 = pneg %p44
      $region70: #{tpu_custom_call.1} parent=67 // pred_check_branch
        %487 = sbr.rel (%p485) target = $region72
      $region71: #{tpu_custom_call.1} parent=67 // pred_region
        %s488 = smul.u32 16, %s24
        %p489 = scmp.lt.s32.totalorder %s488, 31
        %s490 = scalar_select %p489, %s488, 31
        %s491 = smul.addr %s490, 8
        %s492 = scalar_lea.vmem %s0, %s491
        %s493 = smul.u32 16, %s24
      $region72: #{tpu_custom_call.1} parent=67 // pred_fallthru
        _
      // Predicated region
      $region73: #{tpu_custom_call.1} parent=67 // pred_check
        %p494 = pneg %p70
      $region74: #{tpu_custom_call.1} parent=67 // pred_check_branch
        %496 = sbr.rel (%p494) target = $region76
      $region75: #{tpu_custom_call.1} parent=67 // pred_region
        %s497 = smul.u32 16, %s24
        %p498 = scmp.lt.s32.totalorder %s497, 31
        %s499 = scalar_select %p498, %s497, 31
        %s500 = smul.addr %s499, 8
        %s501 = scalar_lea.vmem %s1, %s500
        %s502 = smul.u32 16, %s24
      $region76: #{tpu_custom_call.1} parent=67 // pred_fallthru
        _
      // Predicated region
      $region77: #{tpu_custom_call.1} parent=67 // pred_check
        %p503 = pneg %p96
      $region78: #{tpu_custom_call.1} parent=67 // pred_check_branch
        %505 = sbr.rel (%p503) target = $region80
      $region79: #{tpu_custom_call.1} parent=67 // pred_region
        %s506 = smul.u32 16, %s24
        %p507 = scmp.lt.s32.totalorder %s506, 31
        %s508 = scalar_select %p507, %s506, 31
        %s509 = smul.addr %s508, 8
        %s510 = scalar_lea.vmem %s2, %s509
        %s511 = smul.u32 16, %s24
      $region80: #{tpu_custom_call.1} parent=67 // pred_fallthru
        _
    $region68: #{tpu_custom_call.1} parent=5 // pred_fallthru
      _
    %p512 = scmp.le.s32.totalorder 1, %s24
    %p513 = scmp.lt.s32.totalorder %s24, 3
    %p514 = pnand %p512, %p513
    %p515 = pneg %p514
    // Predicated region
    $region81: #{tpu_custom_call.1} parent=5 // pred_check
      _
    $region82: #{tpu_custom_call.1} parent=5 // pred_check_branch
      %517 = sbr.rel (%p514) target = $region84
    $region83: #{tpu_custom_call.1} parent=5 // pred_region
      %s518 = ssub.s32 %s24, 1
      %s519 = smul.u32 16, %s29
      %p520 = scmp.lt.s32.totalorder %s519, 31
      %s521 = scalar_select %p520, %s519, 31
      %s522 = smul.addr %s521, 8
      %s523 = scalar_lea.vmem %s0, %s522
      %p524 = pneg %p50
      %p525 = pneg %p47
      %s526 = smul.u32 16, %s29
      %p527 = scmp.lt.s32.totalorder %s526, 31
      %s528 = scalar_select %p527, %s526, 31
      %s529 = smul.addr %s528, 8
      %s530 = scalar_lea.vmem %s1, %s529
      %p531 = pneg %p76
      %p532 = pneg %p73
      %s533 = smul.u32 16, %s29
      %p534 = scmp.lt.s32.totalorder %s533, 31
      %s535 = scalar_select %p534, %s533, 31
      %s536 = smul.addr %s535, 8
      %s537 = scalar_lea.vmem %s2, %s536
      %p538 = pneg %p102
      %p539 = pneg %p99
      %p540 = pneg %p123
      %p541 = pneg %p120
      %p542 = pneg %p144
      %p543 = pneg %p141
      %p544 = pneg %p165
      %p545 = pneg %p162
      %p546 = pneg %p186
      %p547 = pneg %p183
      %p548 = pneg %p207
      %p549 = pneg %p204
      %p550 = pneg %p228
      %p551 = pneg %p225
      %p552 = pneg %p249
      %p553 = pneg %p246
      %p554 = pneg %p270
      %p555 = pneg %p267
      %p556 = pneg %p291
      %p557 = pneg %p288
      %p558 = pneg %p312
      %p559 = pneg %p309
      %p560 = pneg %p333
      %p561 = pneg %p330
      %p562 = pneg %p354
      %p563 = pneg %p351
      %p564 = pneg %p375
      %p565 = pneg %p372
      %p566 = pneg %p401
      %p567 = pneg %p398
      %s568 = smul.u32 16, %s29
      %p569 = scmp.lt.s32.totalorder %s568, 31
      %s570 = scalar_select %p569, %s568, 31
      %s571 = smul.addr %s570, 8
      %s572 = scalar_lea.vmem %s16, %s571
      %p573 = pneg %p427
      %p574 = pneg %p424
      %s575 = smul.u32 16, %s29
      %p576 = scmp.lt.s32.totalorder %s575, 31
      %s577 = scalar_select %p576, %s575, 31
      %s578 = smul.addr %s577, 8
      %s579 = scalar_lea.vmem %s17, %s578
      %s580 = smul.u32 16, %s29
      %p581 = scmp.lt.s32.totalorder %s580, 31
      %s582 = scalar_select %p581, %s580, 31
      %s583 = smul.addr %s582, 8
      %s584 = scalar_lea.vmem %s0, %s583
      %s585 = smul.u32 16, %s29
      %s586 = smul.u32 16, %s29
      %p587 = scmp.lt.s32.totalorder %s586, 31
      %s588 = scalar_select %p587, %s586, 31
      %s589 = smul.addr %s588, 8
      %s590 = scalar_lea.vmem %s1, %s589
      %s591 = smul.u32 16, %s29
      %s592 = smul.u32 16, %s29
      %p593 = scmp.lt.s32.totalorder %s592, 31
      %s594 = scalar_select %p593, %s592, 31
      %s595 = smul.addr %s594, 8
      %s596 = scalar_lea.vmem %s2, %s595
      %s597 = smul.u32 16, %s29
      %s598 = smul.u32 16, %s29
      %p599 = scmp.lt.s32.totalorder %s598, 31
      %s600 = scalar_select %p599, %s598, 31
      %s601 = smul.addr %s600, 8
      %s602 = scalar_lea.vmem %s16, %s601
      %s603 = smul.u32 16, %s29
      %s604 = smul.u32 16, %s29
      %p605 = scmp.lt.s32.totalorder %s604, 31
      %s606 = scalar_select %p605, %s604, 31
      %s607 = smul.addr %s606, 8
      %s608 = scalar_lea.vmem %s17, %s607
      %s609 = smul.u32 16, %s29
      %v611 = vld [vmem:[%s584] sm:$0xff]
      %v612 = vld [vmem:[%s584 + $0x8] sm:$0xff]
      %v613 = vld [vmem:[%s584 + $0x10] sm:$0xff]
      %v614 = vld [vmem:[%s584 + $0x18] sm:$0xff]
      %v615 = vld [vmem:[%s584 + $0x20] sm:$0xff]
      %v616 = vld [vmem:[%s584 + $0x28] sm:$0xff]
      %v617 = vld [vmem:[%s584 + $0x30] sm:$0xff]
      %v618 = vld [vmem:[%s584 + $0x38] sm:$0xff]
      %v619 = vld [vmem:[%s584 + $0x40] sm:$0xff]
      %v620 = vld [vmem:[%s584 + $0x48] sm:$0xff]
      %v621 = vld [vmem:[%s584 + $0x50] sm:$0xff]
      %v622 = vld [vmem:[%s584 + $0x58] sm:$0xff]
      %v623 = vld [vmem:[%s584 + $0x60] sm:$0xff]
      %v624 = vld [vmem:[%s584 + $0x68] sm:$0xff]
      %v625 = vld [vmem:[%s584 + $0x70] sm:$0xff]
      %v626 = vld [vmem:[%s584 + $0x78] sm:$0xff]
      %v627 = vpack.c.bf16 %v612, %v611
      %v628 = vpack.c.bf16 %v614, %v613
      %v629 = vpack.c.bf16 %v616, %v615
      %v630 = vpack.c.bf16 %v618, %v617
      %v631 = vpack.c.bf16 %v620, %v619
      %v632 = vpack.c.bf16 %v622, %v621
      %v633 = vpack.c.bf16 %v624, %v623
      %v634 = vpack.c.bf16 %v626, %v625
      %v635 = vld [vmem:[%s3] sm:$0xf]
      %v636 = vld [vmem:[%s3 + $0x4] sm:$0xf]
      %v637 = vld [vmem:[%s590] sm:$0xff]
      %v638 = vld [vmem:[%s590 + $0x8] sm:$0xff]
      %v639 = vld [vmem:[%s590 + $0x10] sm:$0xff]
      %v640 = vld [vmem:[%s590 + $0x18] sm:$0xff]
      %v641 = vld [vmem:[%s590 + $0x20] sm:$0xff]
      %v642 = vld [vmem:[%s590 + $0x28] sm:$0xff]
      %v643 = vld [vmem:[%s590 + $0x30] sm:$0xff]
      %v644 = vld [vmem:[%s590 + $0x38] sm:$0xff]
      %v645 = vld [vmem:[%s590 + $0x40] sm:$0xff]
      %v646 = vld [vmem:[%s590 + $0x48] sm:$0xff]
      %v647 = vld [vmem:[%s590 + $0x50] sm:$0xff]
      %v648 = vld [vmem:[%s590 + $0x58] sm:$0xff]
      %v649 = vld [vmem:[%s590 + $0x60] sm:$0xff]
      %v650 = vld [vmem:[%s590 + $0x68] sm:$0xff]
      %v651 = vld [vmem:[%s590 + $0x70] sm:$0xff]
      %v652 = vld [vmem:[%s590 + $0x78] sm:$0xff]
      %v653 = vpack.c.bf16 %v638, %v637
      %v654 = vpack.c.bf16 %v640, %v639
      %v655 = vpack.c.bf16 %v642, %v641
      %v656 = vpack.c.bf16 %v644, %v643
      %v657 = vpack.c.bf16 %v646, %v645
      %v658 = vpack.c.bf16 %v648, %v647
      %v659 = vpack.c.bf16 %v650, %v649
      %v660 = vpack.c.bf16 %v652, %v651
      %v661 = vld [vmem:[%s4] sm:$0xf]
      %vm662 = vcmask 64512
      %v664 = vsel %vm662, %v653, 0
      %v667 = vsel %vm662, %v654, 0
      %v670 = vsel %vm662, %v655, 0
      %v673 = vsel %vm662, %v656, 0
      %v676 = vsel %vm662, %v657, 0
      %v679 = vsel %vm662, %v658, 0
      %v682 = vsel %vm662, %v659, 0
      %v685 = vsel %vm662, %v660, 0
      %vm687 = vcmask 1043456
      %v689 = vsel %vm687, %v661, 0
      %691 = vmatprep.subr.bf16.mxu0 0
      %692 = vmatpush1.bf16.msra.mxu0 %v689
      %693 = vmatprep.subr.bf16.mxu0 0
      %694 = vmatpush1.bf16.msra.mxu0 0
      %695 = vmatprep.subr.bf16.mxu0 0
      %696 = vmatpush1.bf16.msra.mxu0 0
      %697 = vmatprep.subr.bf16.mxu0 0
      %698 = vmatpush1.bf16.msra.mxu0 0
      %699 = vmatprep.subr.bf16.mxu0 0
      %700 = vmatpush1.bf16.msra.mxu0 0
      %701 = vmatprep.subr.bf16.mxu0 0
      %702 = vmatpush1.bf16.msra.mxu0 0
      %703 = vmatprep.subr.bf16.mxu0 0
      %704 = vmatpush1.bf16.msra.mxu0 0
      %705 = vmatprep.subr.bf16.mxu0 0
      %706 = vmatpush1.bf16.msra.mxu0 0
      %707 = vmatprep.subr.bf16.mxu0 0
      %708 = vmatpush1.bf16.msra.mxu0 0
      %709 = vmatprep.subr.bf16.mxu0 0
      %710 = vmatpush1.bf16.msra.mxu0 0
      %711 = vmatprep.subr.bf16.mxu0 0
      %712 = vmatpush1.bf16.msra.mxu0 0
      %713 = vmatprep.subr.bf16.mxu0 0
      %714 = vmatpush1.bf16.msra.mxu0 0
      %715 = vmatprep.subr.bf16.mxu0 0
      %716 = vmatpush1.bf16.msra.mxu0 0
      %717 = vmatprep.subr.bf16.mxu0 0
      %718 = vmatpush1.bf16.msra.mxu0 0
      %719 = vmatprep.subr.bf16.mxu0 0
      %720 = vmatpush1.bf16.msra.mxu0 0
      %721 = vmatprep.subr.bf16.mxu0 0
      %722 = vmatpush1.bf16.msra.mxu0 0
      %723 = vmatprep.mubr.bf16.mxu0 0
      %724 = vmatmul.mubr.bf16.gmra.mrb[0].mxu0 %v664
      %v725 = vpop.f32.mrb[0].mxu0
      %v726 = vadd.f32 0.0, %v725
      %v727 = vpop.f32.mrb[0].mxu0
      %v728 = vpop.f32.mrb[0].mxu0
      %v729 = vadd.f32 0.0, %v728
      %v730 = vpop.f32.mrb[0].mxu0
      %731 = vmatprep.mubr.bf16.mxu0 0
      %732 = vmatmul.mubr.bf16.gmra.mrb[0].mxu0 %v667
      %v733 = vpop.f32.mrb[0].mxu0
      %v734 = vadd.f32 0.0, %v733
      %v735 = vpop.f32.mrb[0].mxu0
      %v736 = vpop.f32.mrb[0].mxu0
      %v737 = vadd.f32 0.0, %v736
      %v738 = vpop.f32.mrb[0].mxu0
      %739 = vmatprep.mubr.bf16.mxu0 0
      %740 = vmatmul.mubr.bf16.gmra.mrb[0].mxu0 %v670
      %v741 = vpop.f32.mrb[0].mxu0
      %v742 = vadd.f32 0.0, %v741
      %v743 = vpop.f32.mrb[0].mxu0
      %v744 = vpop.f32.mrb[0].mxu0
      %v745 = vadd.f32 0.0, %v744
      %v746 = vpop.f32.mrb[0].mxu0
      %747 = vmatprep.mubr.bf16.mxu0 0
      %748 = vmatmul.mubr.bf16.gmra.mrb[0].mxu0 %v673
      %v749 = vpop.f32.mrb[0].mxu0
      %v750 = vadd.f32 0.0, %v749
      %v751 = vpop.f32.mrb[0].mxu0
      %v752 = vpop.f32.mrb[0].mxu0
      %v753 = vadd.f32 0.0, %v752
      %v754 = vpop.f32.mrb[0].mxu0
      %755 = vmatprep.mubr.bf16.mxu0 0
      %756 = vmatmul.mubr.bf16.gmra.mrb[0].mxu0 %v676
      %v757 = vpop.f32.mrb[0].mxu0
      %v758 = vadd.f32 0.0, %v757
      %v759 = vpop.f32.mrb[0].mxu0
      %v760 = vpop.f32.mrb[0].mxu0
      %v761 = vadd.f32 0.0, %v760
      %v762 = vpop.f32.mrb[0].mxu0
      %763 = vmatprep.mubr.bf16.mxu0 0
      %764 = vmatmul.mubr.bf16.gmra.mrb[0].mxu0 %v679
      %v765 = vpop.f32.mrb[0].mxu0
      %v766 = vadd.f32 0.0, %v765
      %v767 = vpop.f32.mrb[0].mxu0
      %v768 = vpop.f32.mrb[0].mxu0
      %v769 = vadd.f32 0.0, %v768
      %v770 = vpop.f32.mrb[0].mxu0
      %771 = vmatprep.mubr.bf16.mxu0 0
      %772 = vmatmul.mubr.bf16.gmra.mrb[0].mxu0 %v682
      %v773 = vpop.f32.mrb[0].mxu0
      %v774 = vadd.f32 0.0, %v773
      %v775 = vpop.f32.mrb[0].mxu0
      %v776 = vpop.f32.mrb[0].mxu0
      %v777 = vadd.f32 0.0, %v776
      %v778 = vpop.f32.mrb[0].mxu0
      %779 = vmatprep.mubr.bf16.mxu0 0
      %780 = vmatmul.mubr.bf16.gmra.mrb[0].mxu0 %v685
      %v781 = vpop.f32.mrb[0].mxu0
      %v782 = vadd.f32 0.0, %v781
      %v783 = vpop.f32.mrb[0].mxu0
      %v784 = vpop.f32.mrb[0].mxu0
      %v785 = vadd.f32 0.0, %v784
      %v786 = vpop.f32.mrb[0].mxu0
      %787 = vdwg.mxu0
      %v790 = vunpack.c.l.b16 %v635
      %v791 = vunpack.c.l.b16 %v636
      %v792 = vpack.c.b16 %v791, %v790
      %vm794 = vcmask 130048
      %v796 = vsel %vm794, %v627, 0
      %v799 = vsel %vm794, %v628, 0
      %v802 = vsel %vm794, %v629, 0
      %v805 = vsel %vm794, %v630, 0
      %v808 = vsel %vm794, %v631, 0
      %v811 = vsel %vm794, %v632, 0
      %v814 = vsel %vm794, %v633, 0
      %v817 = vsel %vm794, %v634, 0
      %819 = vmatprep.subr.bf16.mxu0 0
      %820 = vmatpush1.bf16.msra.mxu0 %v792
      %821 = vmatprep.subr.bf16.mxu0 0
      %822 = vmatpush1.bf16.msra.mxu0 0
      %823 = vmatprep.subr.bf16.mxu0 0
      %824 = vmatpush1.bf16.msra.mxu0 0
      %825 = vmatprep.subr.bf16.mxu0 0
      %826 = vmatpush1.bf16.msra.mxu0 0
      %827 = vmatprep.subr.bf16.mxu0 0
      %828 = vmatpush1.bf16.msra.mxu0 0
      %829 = vmatprep.subr.bf16.mxu0 0
      %830 = vmatpush1.bf16.msra.mxu0 0
      %831 = vmatprep.subr.bf16.mxu0 0
      %832 = vmatpush1.bf16.msra.mxu0 0
      %833 = vmatprep.subr.bf16.mxu0 0
      %834 = vmatpush1.bf16.msra.mxu0 0
      %835 = vmatprep.subr.bf16.mxu0 0
      %836 = vmatpush1.bf16.msra.mxu0 0
      %837 = vmatprep.subr.bf16.mxu0 0
      %838 = vmatpush1.bf16.msra.mxu0 0
      %839 = vmatprep.subr.bf16.mxu0 0
      %840 = vmatpush1.bf16.msra.mxu0 0
      %841 = vmatprep.subr.bf16.mxu0 0
      %842 = vmatpush1.bf16.msra.mxu0 0
      %843 = vmatprep.subr.bf16.mxu0 0
      %844 = vmatpush1.bf16.msra.mxu0 0
      %845 = vmatprep.subr.bf16.mxu0 0
      %846 = vmatpush1.bf16.msra.mxu0 0
      %847 = vmatprep.subr.bf16.mxu0 0
      %848 = vmatpush1.bf16.msra.mxu0 0
      %849 = vmatprep.subr.bf16.mxu0 0
      %850 = vmatpush1.bf16.msra.mxu0 0
      %851 = vmatprep.mubr.bf16.mxu0 0
      %852 = vmatmul.mubr.bf16.gmra.mrb[0].mxu0 %v796
      %v853 = vpop.f32.mrb[0].mxu0
      %v854 = vadd.f32 %v726, %v853
      %v855 = vpop.f32.mrb[0].mxu0
      %v856 = vpop.f32.mrb[0].mxu0
      %v857 = vadd.f32 %v729, %v856
      %v858 = vpop.f32.mrb[0].mxu0
      %859 = vmatprep.mubr.bf16.mxu0 0
      %860 = vmatmul.mubr.bf16.gmra.mrb[0].mxu0 %v799
      %v861 = vpop.f32.mrb[0].mxu0
      %v862 = vadd.f32 %v734, %v861
      %v863 = vpop.f32.mrb[0].mxu0
      %v864 = vpop.f32.mrb[0].mxu0
      %v865 = vadd.f32 %v737, %v864
      %v866 = vpop.f32.mrb[0].mxu0
      %867 = vmatprep.mubr.bf16.mxu0 0
      %868 = vmatmul.mubr.bf16.gmra.mrb[0].mxu0 %v802
      %v869 = vpop.f32.mrb[0].mxu0
      %v870 = vadd.f32 %v742, %v869
      %v871 = vpop.f32.mrb[0].mxu0
      %v872 = vpop.f32.mrb[0].mxu0
      %v873 = vadd.f32 %v745, %v872
      %v874 = vpop.f32.mrb[0].mxu0
      %875 = vmatprep.mubr.bf16.mxu0 0
      %876 = vmatmul.mubr.bf16.gmra.mrb[0].mxu0 %v805
      %v877 = vpop.f32.mrb[0].mxu0
      %v878 = vadd.f32 %v750, %v877
      %v879 = vpop.f32.mrb[0].mxu0
      %v880 = vpop.f32.mrb[0].mxu0
      %v881 = vadd.f32 %v753, %v880
      %v882 = vpop.f32.mrb[0].mxu0
      %883 = vmatprep.mubr.bf16.mxu0 0
      %884 = vmatmul.mubr.bf16.gmra.mrb[0].mxu0 %v808
      %v885 = vpop.f32.mrb[0].mxu0
      %v886 = vadd.f32 %v758, %v885
      %v887 = vpop.f32.mrb[0].mxu0
      %v888 = vpop.f32.mrb[0].mxu0
      %v889 = vadd.f32 %v761, %v888
      %v890 = vpop.f32.mrb[0].mxu0
      %891 = vmatprep.mubr.bf16.mxu0 0
      %892 = vmatmul.mubr.bf16.gmra.mrb[0].mxu0 %v811
      %v893 = vpop.f32.mrb[0].mxu0
      %v894 = vadd.f32 %v766, %v893
      %v895 = vpop.f32.mrb[0].mxu0
      %v896 = vpop.f32.mrb[0].mxu0
      %v897 = vadd.f32 %v769, %v896
      %v898 = vpop.f32.mrb[0].mxu0
      %899 = vmatprep.mubr.bf16.mxu0 0
      %900 = vmatmul.mubr.bf16.gmra.mrb[0].mxu0 %v814
      %v901 = vpop.f32.mrb[0].mxu0
      %v902 = vadd.f32 %v774, %v901
      %v903 = vpop.f32.mrb[0].mxu0
      %v904 = vpop.f32.mrb[0].mxu0
      %v905 = vadd.f32 %v777, %v904
      %v906 = vpop.f32.mrb[0].mxu0
      %907 = vmatprep.mubr.bf16.mxu0 0
      %908 = vmatmul.mubr.bf16.gmra.mrb[0].mxu0 %v817
      %v909 = vpop.f32.mrb[0].mxu0
      %v910 = vadd.f32 %v782, %v909
      %v911 = vpop.f32.mrb[0].mxu0
      %v912 = vpop.f32.mrb[0].mxu0
      %v913 = vadd.f32 %v785, %v912
      %v914 = vpop.f32.mrb[0].mxu0
      %915 = vdwg.mxu0
      %v916 = vld [vmem:[%s5] sm:$0x1]
      %v918 = vlaneseq
      %v919 = vshrl.u32 %v918, 7
      %v920 = vsub.s32 0, %v919
      %v921 = vrot.slane %v916, %v920
      %v923 = vadd.f32 %v854, %v921
      %v924 = vadd.f32 %v857, %v921
      %v925 = vadd.f32 %v862, %v921
      %v926 = vadd.f32 %v865, %v921
      %v927 = vadd.f32 %v870, %v921
      %v928 = vadd.f32 %v873, %v921
      %v929 = vadd.f32 %v878, %v921
      %v930 = vadd.f32 %v881, %v921
      %v931 = vadd.f32 %v886, %v921
      %v932 = vadd.f32 %v889, %v921
      %v933 = vadd.f32 %v894, %v921
      %v934 = vadd.f32 %v897, %v921
      %v935 = vadd.f32 %v902, %v921
      %v936 = vadd.f32 %v905, %v921
      %v937 = vadd.f32 %v910, %v921
      %v938 = vadd.f32 %v913, %v921
      %v939 = vmax.f32 %v923, 0.0
      %v940 = vmax.f32 %v924, 0.0
      %v941 = vmax.f32 %v925, 0.0
      %v942 = vmax.f32 %v926, 0.0
      %v943 = vmax.f32 %v927, 0.0
      %v944 = vmax.f32 %v928, 0.0
      %v945 = vmax.f32 %v929, 0.0
      %v946 = vmax.f32 %v930, 0.0
      %v947 = vmax.f32 %v931, 0.0
      %v948 = vmax.f32 %v932, 0.0
      %v949 = vmax.f32 %v933, 0.0
      %v950 = vmax.f32 %v934, 0.0
      %v951 = vmax.f32 %v935, 0.0
      %v952 = vmax.f32 %v936, 0.0
      %v953 = vmax.f32 %v937, 0.0
      %v954 = vmax.f32 %v938, 0.0
      %v955 = vpack.c.bf16 %v940, %v939
      %v956 = vpack.c.bf16 %v942, %v941
      %v957 = vpack.c.bf16 %v944, %v943
      %v958 = vpack.c.bf16 %v946, %v945
      %v959 = vpack.c.bf16 %v948, %v947
      %v960 = vpack.c.bf16 %v950, %v949
      %v961 = vpack.c.bf16 %v952, %v951
      %v962 = vpack.c.bf16 %v954, %v953
      %v963 = vld [vmem:[%s6] sm:$0xf]
      %v964 = vld [vmem:[%s6 + $0x4] sm:$0xf]
      %v965 = vld [vmem:[%s6 + $0x8] sm:$0xf]
      %v966 = vld [vmem:[%s6 + $0xc] sm:$0xf]
      %v967 = vld [vmem:[%s7] sm:$0x1]
      %v969 = vlaneseq
      %v970 = vshrl.u32 %v969, 7
      %v971 = vsub.s32 0, %v970
      %v972 = vrot.slane %v967, %v971
      %v978 = vunpack.c.l.b16 %v963
      %v979 = vunpack.c.l.b16 %v964
      %v980 = vunpack.c.l.b16 %v965
      %v981 = vunpack.c.l.b16 %v966
      %v982 = vpack.c.b16 %v979, %v978
      %v983 = vpack.c.b16 %v981, %v980
      %vm986 = vcmask 261120
      %v988 = vsel %vm986, %v955, 0
      %v991 = vsel %vm986, %v956, 0
      %v994 = vsel %vm986, %v957, 0
      %v997 = vsel %vm986, %v958, 0
      %v1000 = vsel %vm986, %v959, 0
      %v1003 = vsel %vm986, %v960, 0
      %v1006 = vsel %vm986, %v961, 0
      %v1009 = vsel %vm986, %v962, 0
      %1011 = vmatprep.subr.bf16.mxu0 0
      %1012 = vmatpush1.bf16.msra.mxu0 %v982
      %1013 = vmatprep.subr.bf16.mxu0 0
      %1014 = vmatpush1.bf16.msra.mxu0 %v983
      %1015 = vmatprep.subr.bf16.mxu0 0
      %1016 = vmatpush1.bf16.msra.mxu0 0
      %1017 = vmatprep.subr.bf16.mxu0 0
      %1018 = vmatpush1.bf16.msra.mxu0 0
      %1019 = vmatprep.subr.bf16.mxu0 0
      %1020 = vmatpush1.bf16.msra.mxu0 0
      %1021 = vmatprep.subr.bf16.mxu0 0
      %1022 = vmatpush1.bf16.msra.mxu0 0
      %1023 = vmatprep.subr.bf16.mxu0 0
      %1024 = vmatpush1.bf16.msra.mxu0 0
      %1025 = vmatprep.subr.bf16.mxu0 0
      %1026 = vmatpush1.bf16.msra.mxu0 0
      %1027 = vmatprep.subr.bf16.mxu0 0
      %1028 = vmatpush1.bf16.msra.mxu0 0
      %1029 = vmatprep.subr.bf16.mxu0 0
      %1030 = vmatpush1.bf16.msra.mxu0 0
      %1031 = vmatprep.subr.bf16.mxu0 0
      %1032 = vmatpush1.bf16.msra.mxu0 0
      %1033 = vmatprep.subr.bf16.mxu0 0
      %1034 = vmatpush1.bf16.msra.mxu0 0
      %1035 = vmatprep.subr.bf16.mxu0 0
      %1036 = vmatpush1.bf16.msra.mxu0 0
      %1037 = vmatprep.subr.bf16.mxu0 0
      %1038 = vmatpush1.bf16.msra.mxu0 0
      %1039 = vmatprep.subr.bf16.mxu0 0
      %1040 = vmatpush1.bf16.msra.mxu0 0
      %1041 = vmatprep.subr.bf16.mxu0 0
      %1042 = vmatpush1.bf16.msra.mxu0 0
      %1043 = vmatprep.mubr.bf16.mxu0 0
      %1044 = vmatmul.mubr.bf16.gmra.mrb[0].mxu0 %v988
      %v1045 = vpop.f32.mrb[0].mxu0
      %v1046 = vadd.f32 %v972, %v1045
      %v1047 = vpop.f32.mrb[0].mxu0
      %v1048 = vpop.f32.mrb[0].mxu0
      %v1049 = vadd.f32 %v972, %v1048
      %v1050 = vpop.f32.mrb[0].mxu0
      %1051 = vmatprep.mubr.bf16.mxu0 0
      %1052 = vmatmul.mubr.bf16.gmra.mrb[0].mxu0 %v991
      %v1053 = vpop.f32.mrb[0].mxu0
      %v1054 = vadd.f32 %v972, %v1053
      %v1055 = vpop.f32.mrb[0].mxu0
      %v1056 = vpop.f32.mrb[0].mxu0
      %v1057 = vadd.f32 %v972, %v1056
      %v1058 = vpop.f32.mrb[0].mxu0
      %1059 = vmatprep.mubr.bf16.mxu0 0
      %1060 = vmatmul.mubr.bf16.gmra.mrb[0].mxu0 %v994
      %v1061 = vpop.f32.mrb[0].mxu0
      %v1062 = vadd.f32 %v972, %v1061
      %v1063 = vpop.f32.mrb[0].mxu0
      %v1064 = vpop.f32.mrb[0].mxu0
      %v1065 = vadd.f32 %v972, %v1064
      %v1066 = vpop.f32.mrb[0].mxu0
      %1067 = vmatprep.mubr.bf16.mxu0 0
      %1068 = vmatmul.mubr.bf16.gmra.mrb[0].mxu0 %v997
      %v1069 = vpop.f32.mrb[0].mxu0
      %v1070 = vadd.f32 %v972, %v1069
      %v1071 = vpop.f32.mrb[0].mxu0
      %v1072 = vpop.f32.mrb[0].mxu0
      %v1073 = vadd.f32 %v972, %v1072
      %v1074 = vpop.f32.mrb[0].mxu0
      %1075 = vmatprep.mubr.bf16.mxu0 0
      %1076 = vmatmul.mubr.bf16.gmra.mrb[0].mxu0 %v1000
      %v1077 = vpop.f32.mrb[0].mxu0
      %v1078 = vadd.f32 %v972, %v1077
      %v1079 = vpop.f32.mrb[0].mxu0
      %v1080 = vpop.f32.mrb[0].mxu0
      %v1081 = vadd.f32 %v972, %v1080
      %v1082 = vpop.f32.mrb[0].mxu0
      %1083 = vmatprep.mubr.bf16.mxu0 0
      %1084 = vmatmul.mubr.bf16.gmra.mrb[0].mxu0 %v1003
      %v1085 = vpop.f32.mrb[0].mxu0
      %v1086 = vadd.f32 %v972, %v1085
      %v1087 = vpop.f32.mrb[0].mxu0
      %v1088 = vpop.f32.mrb[0].mxu0
      %v1089 = vadd.f32 %v972, %v1088
      %v1090 = vpop.f32.mrb[0].mxu0
      %1091 = vmatprep.mubr.bf16.mxu0 0
      %1092 = vmatmul.mubr.bf16.gmra.mrb[0].mxu0 %v1006
      %v1093 = vpop.f32.mrb[0].mxu0
      %v1094 = vadd.f32 %v972, %v1093
      %v1095 = vpop.f32.mrb[0].mxu0
      %v1096 = vpop.f32.mrb[0].mxu0
      %v1097 = vadd.f32 %v972, %v1096
      %v1098 = vpop.f32.mrb[0].mxu0
      %1099 = vmatprep.mubr.bf16.mxu0 0
      %1100 = vmatmul.mubr.bf16.gmra.mrb[0].mxu0 %v1009
      %v1101 = vpop.f32.mrb[0].mxu0
      %v1102 = vadd.f32 %v972, %v1101
      %v1103 = vpop.f32.mrb[0].mxu0
      %v1104 = vpop.f32.mrb[0].mxu0
      %v1105 = vadd.f32 %v972, %v1104
      %v1106 = vpop.f32.mrb[0].mxu0
      %1107 = vdwg.mxu0
      %v1108 = vmax.f32 %v1046, 0.0
      %v1109 = vmax.f32 %v1049, 0.0
      %v1110 = vmax.f32 %v1054, 0.0
      %v1111 = vmax.f32 %v1057, 0.0
      %v1112 = vmax.f32 %v1062, 0.0
      %v1113 = vmax.f32 %v1065, 0.0
      %v1114 = vmax.f32 %v1070, 0.0
      %v1115 = vmax.f32 %v1073, 0.0
      %v1116 = vmax.f32 %v1078, 0.0
      %v1117 = vmax.f32 %v1081, 0.0
      %v1118 = vmax.f32 %v1086, 0.0
      %v1119 = vmax.f32 %v1089, 0.0
      %v1120 = vmax.f32 %v1094, 0.0
      %v1121 = vmax.f32 %v1097, 0.0
      %v1122 = vmax.f32 %v1102, 0.0
      %v1123 = vmax.f32 %v1105, 0.0
      %v1124 = vpack.c.bf16 %v1109, %v1108
      %v1125 = vpack.c.bf16 %v1111, %v1110
      %v1126 = vpack.c.bf16 %v1113, %v1112
      %v1127 = vpack.c.bf16 %v1115, %v1114
      %v1128 = vpack.c.bf16 %v1117, %v1116
      %v1129 = vpack.c.bf16 %v1119, %v1118
      %v1130 = vpack.c.bf16 %v1121, %v1120
      %v1131 = vpack.c.bf16 %v1123, %v1122
      %v1132 = vld [vmem:[%s8] sm:$0xf]
      %v1133 = vld [vmem:[%s8 + $0x4] sm:$0xf]
      %v1134 = vld [vmem:[%s8 + $0x8] sm:$0xf]
      %v1135 = vld [vmem:[%s8 + $0xc] sm:$0xf]
      %v1136 = vld [vmem:[%s9] sm:$0x1]
      %v1138 = vlaneseq
      %v1139 = vshrl.u32 %v1138, 7
      %v1140 = vsub.s32 0, %v1139
      %v1141 = vrot.slane %v1136, %v1140
      %v1147 = vunpack.c.l.b16 %v1132
      %v1148 = vunpack.c.l.b16 %v1133
      %v1149 = vunpack.c.l.b16 %v1134
      %v1150 = vunpack.c.l.b16 %v1135
      %v1151 = vpack.c.b16 %v1148, %v1147
      %v1152 = vpack.c.b16 %v1150, %v1149
      %v1156 = vsel %vm986, %v1124, 0
      %v1159 = vsel %vm986, %v1125, 0
      %v1162 = vsel %vm986, %v1126, 0
      %v1165 = vsel %vm986, %v1127, 0
      %v1168 = vsel %vm986, %v1128, 0
      %v1171 = vsel %vm986, %v1129, 0
      %v1174 = vsel %vm986, %v1130, 0
      %v1177 = vsel %vm986, %v1131, 0
      %1179 = vmatprep.subr.bf16.mxu0 0
      %1180 = vmatpush1.bf16.msra.mxu0 %v1151
      %1181 = vmatprep.subr.bf16.mxu0 0
      %1182 = vmatpush1.bf16.msra.mxu0 %v1152
      %1183 = vmatprep.subr.bf16.mxu0 0
      %1184 = vmatpush1.bf16.msra.mxu0 0
      %1185 = vmatprep.subr.bf16.mxu0 0
      %1186 = vmatpush1.bf16.msra.mxu0 0
      %1187 = vmatprep.subr.bf16.mxu0 0
      %1188 = vmatpush1.bf16.msra.mxu0 0
      %1189 = vmatprep.subr.bf16.mxu0 0
      %1190 = vmatpush1.bf16.msra.mxu0 0
      %1191 = vmatprep.subr.bf16.mxu0 0
      %1192 = vmatpush1.bf16.msra.mxu0 0
      %1193 = vmatprep.subr.bf16.mxu0 0
      %1194 = vmatpush1.bf16.msra.mxu0 0
      %1195 = vmatprep.subr.bf16.mxu0 0
      %1196 = vmatpush1.bf16.msra.mxu0 0
      %1197 = vmatprep.subr.bf16.mxu0 0
      %1198 = vmatpush1.bf16.msra.mxu0 0
      %1199 = vmatprep.subr.bf16.mxu0 0
      %1200 = vmatpush1.bf16.msra.mxu0 0
      %1201 = vmatprep.subr.bf16.mxu0 0
      %1202 = vmatpush1.bf16.msra.mxu0 0
      %1203 = vmatprep.subr.bf16.mxu0 0
      %1204 = vmatpush1.bf16.msra.mxu0 0
      %1205 = vmatprep.subr.bf16.mxu0 0
      %1206 = vmatpush1.bf16.msra.mxu0 0
      %1207 = vmatprep.subr.bf16.mxu0 0
      %1208 = vmatpush1.bf16.msra.mxu0 0
      %1209 = vmatprep.subr.bf16.mxu0 0
      %1210 = vmatpush1.bf16.msra.mxu0 0
      %1211 = vmatprep.mubr.bf16.mxu0 0
      %1212 = vmatmul.mubr.bf16.gmra.mrb[0].mxu0 %v1156
      %v1213 = vpop.f32.mrb[0].mxu0
      %v1214 = vadd.f32 %v1141, %v1213
      %v1215 = vpop.f32.mrb[0].mxu0
      %v1216 = vpop.f32.mrb[0].mxu0
      %v1217 = vadd.f32 %v1141, %v1216
      %v1218 = vpop.f32.mrb[0].mxu0
      %1219 = vmatprep.mubr.bf16.mxu0 0
      %1220 = vmatmul.mubr.bf16.gmra.mrb[0].mxu0 %v1159
      %v1221 = vpop.f32.mrb[0].mxu0
      %v1222 = vadd.f32 %v1141, %v1221
      %v1223 = vpop.f32.mrb[0].mxu0
      %v1224 = vpop.f32.mrb[0].mxu0
      %v1225 = vadd.f32 %v1141, %v1224
      %v1226 = vpop.f32.mrb[0].mxu0
      %1227 = vmatprep.mubr.bf16.mxu0 0
      %1228 = vmatmul.mubr.bf16.gmra.mrb[0].mxu0 %v1162
      %v1229 = vpop.f32.mrb[0].mxu0
      %v1230 = vadd.f32 %v1141, %v1229
      %v1231 = vpop.f32.mrb[0].mxu0
      %v1232 = vpop.f32.mrb[0].mxu0
      %v1233 = vadd.f32 %v1141, %v1232
      %v1234 = vpop.f32.mrb[0].mxu0
      %1235 = vmatprep.mubr.bf16.mxu0 0
      %1236 = vmatmul.mubr.bf16.gmra.mrb[0].mxu0 %v1165
      %v1237 = vpop.f32.mrb[0].mxu0
      %v1238 = vadd.f32 %v1141, %v1237
      %v1239 = vpop.f32.mrb[0].mxu0
      %v1240 = vpop.f32.mrb[0].mxu0
      %v1241 = vadd.f32 %v1141, %v1240
      %v1242 = vpop.f32.mrb[0].mxu0
      %1243 = vmatprep.mubr.bf16.mxu0 0
      %1244 = vmatmul.mubr.bf16.gmra.mrb[0].mxu0 %v1168
      %v1245 = vpop.f32.mrb[0].mxu0
      %v1246 = vadd.f32 %v1141, %v1245
      %v1247 = vpop.f32.mrb[0].mxu0
      %v1248 = vpop.f32.mrb[0].mxu0
      %v1249 = vadd.f32 %v1141, %v1248
      %v1250 = vpop.f32.mrb[0].mxu0
      %1251 = vmatprep.mubr.bf16.mxu0 0
      %1252 = vmatmul.mubr.bf16.gmra.mrb[0].mxu0 %v1171
      %v1253 = vpop.f32.mrb[0].mxu0
      %v1254 = vadd.f32 %v1141, %v1253
      %v1255 = vpop.f32.mrb[0].mxu0
      %v1256 = vpop.f32.mrb[0].mxu0
      %v1257 = vadd.f32 %v1141, %v1256
      %v1258 = vpop.f32.mrb[0].mxu0
      %1259 = vmatprep.mubr.bf16.mxu0 0
      %1260 = vmatmul.mubr.bf16.gmra.mrb[0].mxu0 %v1174
      %v1261 = vpop.f32.mrb[0].mxu0
      %v1262 = vadd.f32 %v1141, %v1261
      %v1263 = vpop.f32.mrb[0].mxu0
      %v1264 = vpop.f32.mrb[0].mxu0
      %v1265 = vadd.f32 %v1141, %v1264
      %v1266 = vpop.f32.mrb[0].mxu0
      %1267 = vmatprep.mubr.bf16.mxu0 0
      %1268 = vmatmul.mubr.bf16.gmra.mrb[0].mxu0 %v1177
      %v1269 = vpop.f32.mrb[0].mxu0
      %v1270 = vadd.f32 %v1141, %v1269
      %v1271 = vpop.f32.mrb[0].mxu0
      %v1272 = vpop.f32.mrb[0].mxu0
      %v1273 = vadd.f32 %v1141, %v1272
      %v1274 = vpop.f32.mrb[0].mxu0
      %1275 = vdwg.mxu0
      %v1276 = vld [vmem:[%s10] sm:$0xf]
      %v1277 = vld [vmem:[%s10 + $0x4] sm:$0xf]
      %v1278 = vld [vmem:[%s10 + $0x8] sm:$0xf]
      %v1279 = vld [vmem:[%s10 + $0xc] sm:$0xf]
      %v1280 = vld [vmem:[%s11] sm:$0x1]
      %v1282 = vlaneseq
      %v1283 = vshrl.u32 %v1282, 7
      %v1284 = vsub.s32 0, %v1283
      %v1285 = vrot.slane %v1280, %v1284
      %v1291 = vunpack.c.l.b16 %v1276
      %v1292 = vunpack.c.l.b16 %v1277
      %v1293 = vunpack.c.l.b16 %v1278
      %v1294 = vunpack.c.l.b16 %v1279
      %v1295 = vpack.c.b16 %v1292, %v1291
      %v1296 = vpack.c.b16 %v1294, %v1293
      %1299 = vmatprep.subr.bf16.mxu0 0
      %1300 = vmatpush1.bf16.msra.mxu0 %v1295
      %1301 = vmatprep.subr.bf16.mxu0 0
      %1302 = vmatpush1.bf16.msra.mxu0 %v1296
      %1303 = vmatprep.subr.bf16.mxu0 0
      %1304 = vmatpush1.bf16.msra.mxu0 0
      %1305 = vmatprep.subr.bf16.mxu0 0
      %1306 = vmatpush1.bf16.msra.mxu0 0
      %1307 = vmatprep.subr.bf16.mxu0 0
      %1308 = vmatpush1.bf16.msra.mxu0 0
      %1309 = vmatprep.subr.bf16.mxu0 0
      %1310 = vmatpush1.bf16.msra.mxu0 0
      %1311 = vmatprep.subr.bf16.mxu0 0
      %1312 = vmatpush1.bf16.msra.mxu0 0
      %1313 = vmatprep.subr.bf16.mxu0 0
      %1314 = vmatpush1.bf16.msra.mxu0 0
      %1315 = vmatprep.subr.bf16.mxu0 0
      %1316 = vmatpush1.bf16.msra.mxu0 0
      %1317 = vmatprep.subr.bf16.mxu0 0
      %1318 = vmatpush1.bf16.msra.mxu0 0
      %1319 = vmatprep.subr.bf16.mxu0 0
      %1320 = vmatpush1.bf16.msra.mxu0 0
      %1321 = vmatprep.subr.bf16.mxu0 0
      %1322 = vmatpush1.bf16.msra.mxu0 0
      %1323 = vmatprep.subr.bf16.mxu0 0
      %1324 = vmatpush1.bf16.msra.mxu0 0
      %1325 = vmatprep.subr.bf16.mxu0 0
      %1326 = vmatpush1.bf16.msra.mxu0 0
      %1327 = vmatprep.subr.bf16.mxu0 0
      %1328 = vmatpush1.bf16.msra.mxu0 0
      %1329 = vmatprep.subr.bf16.mxu0 0
      %1330 = vmatpush1.bf16.msra.mxu0 0
      %1331 = vmatprep.mubr.bf16.mxu0 0
      %1332 = vmatmul.mubr.bf16.gmra.mrb[0].mxu0 %v1156
      %v1333 = vpop.f32.mrb[0].mxu0
      %v1334 = vadd.f32 %v1285, %v1333
      %v1335 = vpop.f32.mrb[0].mxu0
      %v1336 = vpop.f32.mrb[0].mxu0
      %v1337 = vadd.f32 %v1285, %v1336
      %v1338 = vpop.f32.mrb[0].mxu0
      %1339 = vmatprep.mubr.bf16.mxu0 0
      %1340 = vmatmul.mubr.bf16.gmra.mrb[0].mxu0 %v1159
      %v1341 = vpop.f32.mrb[0].mxu0
      %v1342 = vadd.f32 %v1285, %v1341
      %v1343 = vpop.f32.mrb[0].mxu0
      %v1344 = vpop.f32.mrb[0].mxu0
      %v1345 = vadd.f32 %v1285, %v1344
      %v1346 = vpop.f32.mrb[0].mxu0
      %1347 = vmatprep.mubr.bf16.mxu0 0
      %1348 = vmatmul.mubr.bf16.gmra.mrb[0].mxu0 %v1162
      %v1349 = vpop.f32.mrb[0].mxu0
      %v1350 = vadd.f32 %v1285, %v1349
      %v1351 = vpop.f32.mrb[0].mxu0
      %v1352 = vpop.f32.mrb[0].mxu0
      %v1353 = vadd.f32 %v1285, %v1352
      %v1354 = vpop.f32.mrb[0].mxu0
      %1355 = vmatprep.mubr.bf16.mxu0 0
      %1356 = vmatmul.mubr.bf16.gmra.mrb[0].mxu0 %v1165
      %v1357 = vpop.f32.mrb[0].mxu0
      %v1358 = vadd.f32 %v1285, %v1357
      %v1359 = vpop.f32.mrb[0].mxu0
      %v1360 = vpop.f32.mrb[0].mxu0
      %v1361 = vadd.f32 %v1285, %v1360
      %v1362 = vpop.f32.mrb[0].mxu0
      %1363 = vmatprep.mubr.bf16.mxu0 0
      %1364 = vmatmul.mubr.bf16.gmra.mrb[0].mxu0 %v1168
      %v1365 = vpop.f32.mrb[0].mxu0
      %v1366 = vadd.f32 %v1285, %v1365
      %v1367 = vpop.f32.mrb[0].mxu0
      %v1368 = vpop.f32.mrb[0].mxu0
      %v1369 = vadd.f32 %v1285, %v1368
      %v1370 = vpop.f32.mrb[0].mxu0
      %1371 = vmatprep.mubr.bf16.mxu0 0
      %1372 = vmatmul.mubr.bf16.gmra.mrb[0].mxu0 %v1171
      %v1373 = vpop.f32.mrb[0].mxu0
      %v1374 = vadd.f32 %v1285, %v1373
      %v1375 = vpop.f32.mrb[0].mxu0
      %v1376 = vpop.f32.mrb[0].mxu0
      %v1377 = vadd.f32 %v1285, %v1376
      %v1378 = vpop.f32.mrb[0].mxu0
      %1379 = vmatprep.mubr.bf16.mxu0 0
      %1380 = vmatmul.mubr.bf16.gmra.mrb[0].mxu0 %v1174
      %v1381 = vpop.f32.mrb[0].mxu0
      %v1382 = vadd.f32 %v1285, %v1381
      %v1383 = vpop.f32.mrb[0].mxu0
      %v1384 = vpop.f32.mrb[0].mxu0
      %v1385 = vadd.f32 %v1285, %v1384
      %v1386 = vpop.f32.mrb[0].mxu0
      %1387 = vmatprep.mubr.bf16.mxu0 0
      %1388 = vmatmul.mubr.bf16.gmra.mrb[0].mxu0 %v1177
      %v1389 = vpop.f32.mrb[0].mxu0
      %v1390 = vadd.f32 %v1285, %v1389
      %v1391 = vpop.f32.mrb[0].mxu0
      %v1392 = vpop.f32.mrb[0].mxu0
      %v1393 = vadd.f32 %v1285, %v1392
      %v1394 = vpop.f32.mrb[0].mxu0
      %1395 = vdwg.mxu0
      %v1396 = vmul.f32 %v1334, 0.5
      %v1397 = vmul.f32 %v1337, 0.5
      %v1398 = vmul.f32 %v1342, 0.5
      %v1399 = vmul.f32 %v1345, 0.5
      %v1400 = vmul.f32 %v1350, 0.5
      %v1401 = vmul.f32 %v1353, 0.5
      %v1402 = vmul.f32 %v1358, 0.5
      %v1403 = vmul.f32 %v1361, 0.5
      %v1404 = vmul.f32 %v1366, 0.5
      %v1405 = vmul.f32 %v1369, 0.5
      %v1406 = vmul.f32 %v1374, 0.5
      %v1407 = vmul.f32 %v1377, 0.5
      %v1408 = vmul.f32 %v1382, 0.5
      %v1409 = vmul.f32 %v1385, 0.5
      %v1410 = vmul.f32 %v1390, 0.5
      %v1411 = vmul.f32 %v1393, 0.5
      %v1412 = vmul.f32 %v1396, 1.442695
      %v1413 = vpow.pop %v1412
      %v1414 = vmul.f32 %v1397, 1.442695
      %v1415 = vpow.pop %v1414
      %v1416 = vmul.f32 %v1398, 1.442695
      %v1417 = vpow.pop %v1416
      %v1418 = vmul.f32 %v1399, 1.442695
      %v1419 = vpow.pop %v1418
      %v1420 = vmul.f32 %v1400, 1.442695
      %v1421 = vpow.pop %v1420
      %v1422 = vmul.f32 %v1401, 1.442695
      %v1423 = vpow.pop %v1422
      %v1424 = vmul.f32 %v1402, 1.442695
      %v1425 = vpow.pop %v1424
      %v1426 = vmul.f32 %v1403, 1.442695
      %v1427 = vpow.pop %v1426
      %v1428 = vmul.f32 %v1404, 1.442695
      %v1429 = vpow.pop %v1428
      %v1430 = vmul.f32 %v1405, 1.442695
      %v1431 = vpow.pop %v1430
      %v1432 = vmul.f32 %v1406, 1.442695
      %v1433 = vpow.pop %v1432
      %v1434 = vmul.f32 %v1407, 1.442695
      %v1435 = vpow.pop %v1434
      %v1436 = vmul.f32 %v1408, 1.442695
      %v1437 = vpow.pop %v1436
      %v1438 = vmul.f32 %v1409, 1.442695
      %v1439 = vpow.pop %v1438
      %v1440 = vmul.f32 %v1410, 1.442695
      %v1441 = vpow.pop %v1440
      %v1442 = vmul.f32 %v1411, 1.442695
      %v1443 = vpow.pop %v1442
      %v1444 = vld [vmem:[%s596] sm:$0xff]
      %v1445 = vld [vmem:[%s596 + $0x8] sm:$0xff]
      %v1446 = vld [vmem:[%s596 + $0x10] sm:$0xff]
      %v1447 = vld [vmem:[%s596 + $0x18] sm:$0xff]
      %v1448 = vld [vmem:[%s596 + $0x20] sm:$0xff]
      %v1449 = vld [vmem:[%s596 + $0x28] sm:$0xff]
      %v1450 = vld [vmem:[%s596 + $0x30] sm:$0xff]
      %v1451 = vld [vmem:[%s596 + $0x38] sm:$0xff]
      %v1452 = vld [vmem:[%s596 + $0x40] sm:$0xff]
      %v1453 = vld [vmem:[%s596 + $0x48] sm:$0xff]
      %v1454 = vld [vmem:[%s596 + $0x50] sm:$0xff]
      %v1455 = vld [vmem:[%s596 + $0x58] sm:$0xff]
      %v1456 = vld [vmem:[%s596 + $0x60] sm:$0xff]
      %v1457 = vld [vmem:[%s596 + $0x68] sm:$0xff]
      %v1458 = vld [vmem:[%s596 + $0x70] sm:$0xff]
      %v1459 = vld [vmem:[%s596 + $0x78] sm:$0xff]
      %v1460 = vmul.f32 %v1413, %v1444
      %v1461 = vmul.f32 %v1415, %v1445
      %v1462 = vmul.f32 %v1417, %v1446
      %v1463 = vmul.f32 %v1419, %v1447
      %v1464 = vmul.f32 %v1421, %v1448
      %v1465 = vmul.f32 %v1423, %v1449
      %v1466 = vmul.f32 %v1425, %v1450
      %v1467 = vmul.f32 %v1427, %v1451
      %v1468 = vmul.f32 %v1429, %v1452
      %v1469 = vmul.f32 %v1431, %v1453
      %v1470 = vmul.f32 %v1433, %v1454
      %v1471 = vmul.f32 %v1435, %v1455
      %v1472 = vmul.f32 %v1437, %v1456
      %v1473 = vmul.f32 %v1439, %v1457
      %v1474 = vmul.f32 %v1441, %v1458
      %v1475 = vmul.f32 %v1443, %v1459
      %v1476 = vadd.f32 %v1214, %v1460
      %v1477 = vadd.f32 %v1217, %v1461
      %v1478 = vadd.f32 %v1222, %v1462
      %v1479 = vadd.f32 %v1225, %v1463
      %v1480 = vadd.f32 %v1230, %v1464
      %v1481 = vadd.f32 %v1233, %v1465
      %v1482 = vadd.f32 %v1238, %v1466
      %v1483 = vadd.f32 %v1241, %v1467
      %v1484 = vadd.f32 %v1246, %v1468
      %v1485 = vadd.f32 %v1249, %v1469
      %v1486 = vadd.f32 %v1254, %v1470
      %v1487 = vadd.f32 %v1257, %v1471
      %v1488 = vadd.f32 %v1262, %v1472
      %v1489 = vadd.f32 %v1265, %v1473
      %v1490 = vadd.f32 %v1270, %v1474
      %v1491 = vadd.f32 %v1273, %v1475
      %v1492 = vpack.c.bf16 %v1477, %v1476
      %v1493 = vpack.c.bf16 %v1479, %v1478
      %v1494 = vpack.c.bf16 %v1481, %v1480
      %v1495 = vpack.c.bf16 %v1483, %v1482
      %v1496 = vpack.c.bf16 %v1485, %v1484
      %v1497 = vpack.c.bf16 %v1487, %v1486
      %v1498 = vpack.c.bf16 %v1489, %v1488
      %v1499 = vpack.c.bf16 %v1491, %v1490
      %v1500 = vld [vmem:[%s12] sm:$0xf]
      %v1501 = vld [vmem:[%s12 + $0x4] sm:$0xf]
      %v1502 = vld [vmem:[%s13] sm:$0x1]
      %v1504 = vlaneseq
      %v1505 = vshrl.u32 %v1504, 7
      %v1506 = vsub.s32 0, %v1505
      %v1507 = vrot.slane %v1502, %v1506
      %v1511 = vunpack.c.l.b16 %v1500
      %v1512 = vunpack.c.l.b16 %v1501
      %v1513 = vpack.c.b16 %v1512, %v1511
      %v1516 = vsel %vm794, %v1492, 0
      %v1519 = vsel %vm794, %v1493, 0
      %v1522 = vsel %vm794, %v1494, 0
      %v1525 = vsel %vm794, %v1495, 0
      %v1528 = vsel %vm794, %v1496, 0
      %v1531 = vsel %vm794, %v1497, 0
      %v1534 = vsel %vm794, %v1498, 0
      %v1537 = vsel %vm794, %v1499, 0
      %1539 = vmatprep.subr.bf16.mxu0 0
      %1540 = vmatpush1.bf16.msra.mxu0 %v1513
      %1541 = vmatprep.subr.bf16.mxu0 0
      %1542 = vmatpush1.bf16.msra.mxu0 0
      %1543 = vmatprep.subr.bf16.mxu0 0
      %1544 = vmatpush1.bf16.msra.mxu0 0
      %1545 = vmatprep.subr.bf16.mxu0 0
      %1546 = vmatpush1.bf16.msra.mxu0 0
      %1547 = vmatprep.subr.bf16.mxu0 0
      %1548 = vmatpush1.bf16.msra.mxu0 0
      %1549 = vmatprep.subr.bf16.mxu0 0
      %1550 = vmatpush1.bf16.msra.mxu0 0
      %1551 = vmatprep.subr.bf16.mxu0 0
      %1552 = vmatpush1.bf16.msra.mxu0 0
      %1553 = vmatprep.subr.bf16.mxu0 0
      %1554 = vmatpush1.bf16.msra.mxu0 0
      %1555 = vmatprep.subr.bf16.mxu0 0
      %1556 = vmatpush1.bf16.msra.mxu0 0
      %1557 = vmatprep.subr.bf16.mxu0 0
      %1558 = vmatpush1.bf16.msra.mxu0 0
      %1559 = vmatprep.subr.bf16.mxu0 0
      %1560 = vmatpush1.bf16.msra.mxu0 0
      %1561 = vmatprep.subr.bf16.mxu0 0
      %1562 = vmatpush1.bf16.msra.mxu0 0
      %1563 = vmatprep.subr.bf16.mxu0 0
      %1564 = vmatpush1.bf16.msra.mxu0 0
      %1565 = vmatprep.subr.bf16.mxu0 0
      %1566 = vmatpush1.bf16.msra.mxu0 0
      %1567 = vmatprep.subr.bf16.mxu0 0
      %1568 = vmatpush1.bf16.msra.mxu0 0
      %1569 = vmatprep.subr.bf16.mxu0 0
      %1570 = vmatpush1.bf16.msra.mxu0 0
      %1571 = vmatprep.mubr.bf16.mxu0 0
      %1572 = vmatmul.mubr.bf16.gmra.mrb[0].mxu0 %v1516
      %v1573 = vpop.f32.mrb[0].mxu0
      %v1574 = vadd.f32 %v1507, %v1573
      %v1575 = vpop.f32.mrb[0].mxu0
      %v1576 = vpop.f32.mrb[0].mxu0
      %v1577 = vadd.f32 %v1507, %v1576
      %v1578 = vpop.f32.mrb[0].mxu0
      %1579 = vmatprep.mubr.bf16.mxu0 0
      %1580 = vmatmul.mubr.bf16.gmra.mrb[0].mxu0 %v1519
      %v1581 = vpop.f32.mrb[0].mxu0
      %v1582 = vadd.f32 %v1507, %v1581
      %v1583 = vpop.f32.mrb[0].mxu0
      %v1584 = vpop.f32.mrb[0].mxu0
      %v1585 = vadd.f32 %v1507, %v1584
      %v1586 = vpop.f32.mrb[0].mxu0
      %1587 = vmatprep.mubr.bf16.mxu0 0
      %1588 = vmatmul.mubr.bf16.gmra.mrb[0].mxu0 %v1522
      %v1589 = vpop.f32.mrb[0].mxu0
      %v1590 = vadd.f32 %v1507, %v1589
      %v1591 = vpop.f32.mrb[0].mxu0
      %v1592 = vpop.f32.mrb[0].mxu0
      %v1593 = vadd.f32 %v1507, %v1592
      %v1594 = vpop.f32.mrb[0].mxu0
      %1595 = vmatprep.mubr.bf16.mxu0 0
      %1596 = vmatmul.mubr.bf16.gmra.mrb[0].mxu0 %v1525
      %v1597 = vpop.f32.mrb[0].mxu0
      %v1598 = vadd.f32 %v1507, %v1597
      %v1599 = vpop.f32.mrb[0].mxu0
      %v1600 = vpop.f32.mrb[0].mxu0
      %v1601 = vadd.f32 %v1507, %v1600
      %v1602 = vpop.f32.mrb[0].mxu0
      %1603 = vmatprep.mubr.bf16.mxu0 0
      %1604 = vmatmul.mubr.bf16.gmra.mrb[0].mxu0 %v1528
      %v1605 = vpop.f32.mrb[0].mxu0
      %v1606 = vadd.f32 %v1507, %v1605
      %v1607 = vpop.f32.mrb[0].mxu0
      %v1608 = vpop.f32.mrb[0].mxu0
      %v1609 = vadd.f32 %v1507, %v1608
      %v1610 = vpop.f32.mrb[0].mxu0
      %1611 = vmatprep.mubr.bf16.mxu0 0
      %1612 = vmatmul.mubr.bf16.gmra.mrb[0].mxu0 %v1531
      %v1613 = vpop.f32.mrb[0].mxu0
      %v1614 = vadd.f32 %v1507, %v1613
      %v1615 = vpop.f32.mrb[0].mxu0
      %v1616 = vpop.f32.mrb[0].mxu0
      %v1617 = vadd.f32 %v1507, %v1616
      %v1618 = vpop.f32.mrb[0].mxu0
      %1619 = vmatprep.mubr.bf16.mxu0 0
      %1620 = vmatmul.mubr.bf16.gmra.mrb[0].mxu0 %v1534
      %v1621 = vpop.f32.mrb[0].mxu0
      %v1622 = vadd.f32 %v1507, %v1621
      %v1623 = vpop.f32.mrb[0].mxu0
      %v1624 = vpop.f32.mrb[0].mxu0
      %v1625 = vadd.f32 %v1507, %v1624
      %v1626 = vpop.f32.mrb[0].mxu0
      %1627 = vmatprep.mubr.bf16.mxu0 0
      %1628 = vmatmul.mubr.bf16.gmra.mrb[0].mxu0 %v1537
      %v1629 = vpop.f32.mrb[0].mxu0
      %v1630 = vadd.f32 %v1507, %v1629
      %v1631 = vpop.f32.mrb[0].mxu0
      %v1632 = vpop.f32.mrb[0].mxu0
      %v1633 = vadd.f32 %v1507, %v1632
      %v1634 = vpop.f32.mrb[0].mxu0
      %1635 = vdwg.mxu0
      %v1636 = vmax.f32 %v1574, 0.0
      %v1637 = vmax.f32 %v1577, 0.0
      %v1638 = vmax.f32 %v1582, 0.0
      %v1639 = vmax.f32 %v1585, 0.0
      %v1640 = vmax.f32 %v1590, 0.0
      %v1641 = vmax.f32 %v1593, 0.0
      %v1642 = vmax.f32 %v1598, 0.0
      %v1643 = vmax.f32 %v1601, 0.0
      %v1644 = vmax.f32 %v1606, 0.0
      %v1645 = vmax.f32 %v1609, 0.0
      %v1646 = vmax.f32 %v1614, 0.0
      %v1647 = vmax.f32 %v1617, 0.0
      %v1648 = vmax.f32 %v1622, 0.0
      %v1649 = vmax.f32 %v1625, 0.0
      %v1650 = vmax.f32 %v1630, 0.0
      %v1651 = vmax.f32 %v1633, 0.0
      %v1652 = vpack.c.bf16 %v1637, %v1636
      %v1653 = vpack.c.bf16 %v1639, %v1638
      %v1654 = vpack.c.bf16 %v1641, %v1640
      %v1655 = vpack.c.bf16 %v1643, %v1642
      %v1656 = vpack.c.bf16 %v1645, %v1644
      %v1657 = vpack.c.bf16 %v1647, %v1646
      %v1658 = vpack.c.bf16 %v1649, %v1648
      %v1659 = vpack.c.bf16 %v1651, %v1650
      %v1660 = vld [vmem:[%s14] sm:$0xf]
      %v1661 = vld [vmem:[%s14 + $0x4] sm:$0xf]
      %v1662 = vld [vmem:[%s14 + $0x8] sm:$0xf]
      %v1663 = vld [vmem:[%s14 + $0xc] sm:$0xf]
      %v1664 = vld [vmem:[%s15] sm:$0x1]
      %v1666 = vlaneseq
      %v1667 = vshrl.u32 %v1666, 7
      %v1668 = vsub.s32 0, %v1667
      %v1669 = vrot.slane %v1664, %v1668
      %v1675 = vunpack.c.l.b16 %v1660
      %v1676 = vunpack.c.l.b16 %v1661
      %v1677 = vunpack.c.l.b16 %v1662
      %v1678 = vunpack.c.l.b16 %v1663
      %v1679 = vpack.c.b16 %v1676, %v1675
      %v1680 = vpack.c.b16 %v1678, %v1677
      %v1684 = vsel %vm986, %v1652, 0
      %v1687 = vsel %vm986, %v1653, 0
      %v1690 = vsel %vm986, %v1654, 0
      %v1693 = vsel %vm986, %v1655, 0
      %v1696 = vsel %vm986, %v1656, 0
      %v1699 = vsel %vm986, %v1657, 0
      %v1702 = vsel %vm986, %v1658, 0
      %v1705 = vsel %vm986, %v1659, 0
      %1707 = vmatprep.subr.bf16.mxu0 0
      %1708 = vmatpush1.bf16.msra.mxu0 %v1679
      %1709 = vmatprep.subr.bf16.mxu0 0
      %1710 = vmatpush1.bf16.msra.mxu0 %v1680
      %1711 = vmatprep.subr.bf16.mxu0 0
      %1712 = vmatpush1.bf16.msra.mxu0 0
      %1713 = vmatprep.subr.bf16.mxu0 0
      %1714 = vmatpush1.bf16.msra.mxu0 0
      %1715 = vmatprep.subr.bf16.mxu0 0
      %1716 = vmatpush1.bf16.msra.mxu0 0
      %1717 = vmatprep.subr.bf16.mxu0 0
      %1718 = vmatpush1.bf16.msra.mxu0 0
      %1719 = vmatprep.subr.bf16.mxu0 0
      %1720 = vmatpush1.bf16.msra.mxu0 0
      %1721 = vmatprep.subr.bf16.mxu0 0
      %1722 = vmatpush1.bf16.msra.mxu0 0
      %1723 = vmatprep.subr.bf16.mxu0 0
      %1724 = vmatpush1.bf16.msra.mxu0 0
      %1725 = vmatprep.subr.bf16.mxu0 0
      %1726 = vmatpush1.bf16.msra.mxu0 0
      %1727 = vmatprep.subr.bf16.mxu0 0
      %1728 = vmatpush1.bf16.msra.mxu0 0
      %1729 = vmatprep.subr.bf16.mxu0 0
      %1730 = vmatpush1.bf16.msra.mxu0 0
      %1731 = vmatprep.subr.bf16.mxu0 0
      %1732 = vmatpush1.bf16.msra.mxu0 0
      %1733 = vmatprep.subr.bf16.mxu0 0
      %1734 = vmatpush1.bf16.msra.mxu0 0
      %1735 = vmatprep.subr.bf16.mxu0 0
      %1736 = vmatpush1.bf16.msra.mxu0 0
      %1737 = vmatprep.subr.bf16.mxu0 0
      %1738 = vmatpush1.bf16.msra.mxu0 0
      %1739 = vmatprep.mubr.bf16.mxu0 0
      %1740 = vmatmul.mubr.bf16.gmra.mrb[0].mxu0 %v1684
      %v1741 = vpop.f32.mrb[0].mxu0
      %v1742 = vadd.f32 %v1669, %v1741
      %v1743 = vpop.f32.mrb[0].mxu0
      %v1744 = vpop.f32.mrb[0].mxu0
      %v1745 = vadd.f32 %v1669, %v1744
      %v1746 = vpop.f32.mrb[0].mxu0
      %1747 = vmatprep.mubr.bf16.mxu0 0
      %1748 = vmatmul.mubr.bf16.gmra.mrb[0].mxu0 %v1687
      %v1749 = vpop.f32.mrb[0].mxu0
      %v1750 = vadd.f32 %v1669, %v1749
      %v1751 = vpop.f32.mrb[0].mxu0
      %v1752 = vpop.f32.mrb[0].mxu0
      %v1753 = vadd.f32 %v1669, %v1752
      %v1754 = vpop.f32.mrb[0].mxu0
      %1755 = vmatprep.mubr.bf16.mxu0 0
      %1756 = vmatmul.mubr.bf16.gmra.mrb[0].mxu0 %v1690
      %v1757 = vpop.f32.mrb[0].mxu0
      %v1758 = vadd.f32 %v1669, %v1757
      %v1759 = vpop.f32.mrb[0].mxu0
      %v1760 = vpop.f32.mrb[0].mxu0
      %v1761 = vadd.f32 %v1669, %v1760
      %v1762 = vpop.f32.mrb[0].mxu0
      %1763 = vmatprep.mubr.bf16.mxu0 0
      %1764 = vmatmul.mubr.bf16.gmra.mrb[0].mxu0 %v1693
      %v1765 = vpop.f32.mrb[0].mxu0
      %v1766 = vadd.f32 %v1669, %v1765
      %v1767 = vpop.f32.mrb[0].mxu0
      %v1768 = vpop.f32.mrb[0].mxu0
      %v1769 = vadd.f32 %v1669, %v1768
      %v1770 = vpop.f32.mrb[0].mxu0
      %1771 = vmatprep.mubr.bf16.mxu0 0
      %1772 = vmatmul.mubr.bf16.gmra.mrb[0].mxu0 %v1696
      %v1773 = vpop.f32.mrb[0].mxu0
      %v1774 = vadd.f32 %v1669, %v1773
      %v1775 = vpop.f32.mrb[0].mxu0
      %v1776 = vpop.f32.mrb[0].mxu0
      %v1777 = vadd.f32 %v1669, %v1776
      %v1778 = vpop.f32.mrb[0].mxu0
      %1779 = vmatprep.mubr.bf16.mxu0 0
      %1780 = vmatmul.mubr.bf16.gmra.mrb[0].mxu0 %v1699
      %v1781 = vpop.f32.mrb[0].mxu0
      %v1782 = vadd.f32 %v1669, %v1781
      %v1783 = vpop.f32.mrb[0].mxu0
      %v1784 = vpop.f32.mrb[0].mxu0
      %v1785 = vadd.f32 %v1669, %v1784
      %v1786 = vpop.f32.mrb[0].mxu0
      %1787 = vmatprep.mubr.bf16.mxu0 0
      %1788 = vmatmul.mubr.bf16.gmra.mrb[0].mxu0 %v1702
      %v1789 = vpop.f32.mrb[0].mxu0
      %v1790 = vadd.f32 %v1669, %v1789
      %v1791 = vpop.f32.mrb[0].mxu0
      %v1792 = vpop.f32.mrb[0].mxu0
      %v1793 = vadd.f32 %v1669, %v1792
      %v1794 = vpop.f32.mrb[0].mxu0
      %1795 = vmatprep.mubr.bf16.mxu0 0
      %1796 = vmatmul.mubr.bf16.gmra.mrb[0].mxu0 %v1705
      %v1797 = vpop.f32.mrb[0].mxu0
      %v1798 = vadd.f32 %v1669, %v1797
      %v1799 = vpop.f32.mrb[0].mxu0
      %v1800 = vpop.f32.mrb[0].mxu0
      %v1801 = vadd.f32 %v1669, %v1800
      %v1802 = vpop.f32.mrb[0].mxu0
      %1803 = vdwg.mxu0
      %v1804 = vsub.f32 0.0, %v1742
      %v1805 = vsub.f32 0.0, %v1745
      %v1806 = vsub.f32 0.0, %v1750
      %v1807 = vsub.f32 0.0, %v1753
      %v1808 = vsub.f32 0.0, %v1758
      %v1809 = vsub.f32 0.0, %v1761
      %v1810 = vsub.f32 0.0, %v1766
      %v1811 = vsub.f32 0.0, %v1769
      %v1812 = vsub.f32 0.0, %v1774
      %v1813 = vsub.f32 0.0, %v1777
      %v1814 = vsub.f32 0.0, %v1782
      %v1815 = vsub.f32 0.0, %v1785
      %v1816 = vsub.f32 0.0, %v1790
      %v1817 = vsub.f32 0.0, %v1793
      %v1818 = vsub.f32 0.0, %v1798
      %v1819 = vsub.f32 0.0, %v1801
      %v1820 = vmul.f32 %v1804, 1.442695
      %v1821 = vpow.pop %v1820
      %v1822 = vmul.f32 %v1805, 1.442695
      %v1823 = vpow.pop %v1822
      %v1824 = vmul.f32 %v1806, 1.442695
      %v1825 = vpow.pop %v1824
      %v1826 = vmul.f32 %v1807, 1.442695
      %v1827 = vpow.pop %v1826
      %v1828 = vmul.f32 %v1808, 1.442695
      %v1829 = vpow.pop %v1828
      %v1830 = vmul.f32 %v1809, 1.442695
      %v1831 = vpow.pop %v1830
      %v1832 = vmul.f32 %v1810, 1.442695
      %v1833 = vpow.pop %v1832
      %v1834 = vmul.f32 %v1811, 1.442695
      %v1835 = vpow.pop %v1834
      %v1836 = vmul.f32 %v1812, 1.442695
      %v1837 = vpow.pop %v1836
      %v1838 = vmul.f32 %v1813, 1.442695
      %v1839 = vpow.pop %v1838
      %v1840 = vmul.f32 %v1814, 1.442695
      %v1841 = vpow.pop %v1840
      %v1842 = vmul.f32 %v1815, 1.442695
      %v1843 = vpow.pop %v1842
      %v1844 = vmul.f32 %v1816, 1.442695
      %v1845 = vpow.pop %v1844
      %v1846 = vmul.f32 %v1817, 1.442695
      %v1847 = vpow.pop %v1846
      %v1848 = vmul.f32 %v1818, 1.442695
      %v1849 = vpow.pop %v1848
      %v1850 = vmul.f32 %v1819, 1.442695
      %v1851 = vpow.pop %v1850
      %v1852 = vadd.f32 %v1821, 1.0
      %v1853 = vadd.f32 %v1823, 1.0
      %v1854 = vadd.f32 %v1825, 1.0
      %v1855 = vadd.f32 %v1827, 1.0
      %v1856 = vadd.f32 %v1829, 1.0
      %v1857 = vadd.f32 %v1831, 1.0
      %v1858 = vadd.f32 %v1833, 1.0
      %v1859 = vadd.f32 %v1835, 1.0
      %v1860 = vadd.f32 %v1837, 1.0
      %v1861 = vadd.f32 %v1839, 1.0
      %v1862 = vadd.f32 %v1841, 1.0
      %v1863 = vadd.f32 %v1843, 1.0
      %v1864 = vadd.f32 %v1845, 1.0
      %v1865 = vadd.f32 %v1847, 1.0
      %v1866 = vadd.f32 %v1849, 1.0
      %v1867 = vadd.f32 %v1851, 1.0
      %v1868 = vrcp.pop %v1852
      %v1869 = vmul.f32 1.0, %v1868
      %v1870 = vrcp.pop %v1853
      %v1871 = vmul.f32 1.0, %v1870
      %v1872 = vrcp.pop %v1854
      %v1873 = vmul.f32 1.0, %v1872
      %v1874 = vrcp.pop %v1855
      %v1875 = vmul.f32 1.0, %v1874
      %v1876 = vrcp.pop %v1856
      %v1877 = vmul.f32 1.0, %v1876
      %v1878 = vrcp.pop %v1857
      %v1879 = vmul.f32 1.0, %v1878
      %v1880 = vrcp.pop %v1858
      %v1881 = vmul.f32 1.0, %v1880
      %v1882 = vrcp.pop %v1859
      %v1883 = vmul.f32 1.0, %v1882
      %v1884 = vrcp.pop %v1860
      %v1885 = vmul.f32 1.0, %v1884
      %v1886 = vrcp.pop %v1861
      %v1887 = vmul.f32 1.0, %v1886
      %v1888 = vrcp.pop %v1862
      %v1889 = vmul.f32 1.0, %v1888
      %v1890 = vrcp.pop %v1863
      %v1891 = vmul.f32 1.0, %v1890
      %v1892 = vrcp.pop %v1864
      %v1893 = vmul.f32 1.0, %v1892
      %v1894 = vrcp.pop %v1865
      %v1895 = vmul.f32 1.0, %v1894
      %v1896 = vrcp.pop %v1866
      %v1897 = vmul.f32 1.0, %v1896
      %v1898 = vrcp.pop %v1867
      %v1899 = vmul.f32 1.0, %v1898
      %1900 = vst.msk [vmem:[%s602] sm:$0xff] %vm794, %v1869
      %1901 = vst.msk [vmem:[%s602 + $0x8] sm:$0xff] %vm794, %v1871
      %1902 = vst.msk [vmem:[%s602 + $0x10] sm:$0xff] %vm794, %v1873
      %1903 = vst.msk [vmem:[%s602 + $0x18] sm:$0xff] %vm794, %v1875
      %1904 = vst.msk [vmem:[%s602 + $0x20] sm:$0xff] %vm794, %v1877
      %1905 = vst.msk [vmem:[%s602 + $0x28] sm:$0xff] %vm794, %v1879
      %1906 = vst.msk [vmem:[%s602 + $0x30] sm:$0xff] %vm794, %v1881
      %1907 = vst.msk [vmem:[%s602 + $0x38] sm:$0xff] %vm794, %v1883
      %1908 = vst.msk [vmem:[%s602 + $0x40] sm:$0xff] %vm794, %v1885
      %1909 = vst.msk [vmem:[%s602 + $0x48] sm:$0xff] %vm794, %v1887
      %1910 = vst.msk [vmem:[%s602 + $0x50] sm:$0xff] %vm794, %v1889
      %1911 = vst.msk [vmem:[%s602 + $0x58] sm:$0xff] %vm794, %v1891
      %1912 = vst.msk [vmem:[%s602 + $0x60] sm:$0xff] %vm794, %v1893
      %1913 = vst.msk [vmem:[%s602 + $0x68] sm:$0xff] %vm794, %v1895
      %1914 = vst.msk [vmem:[%s602 + $0x70] sm:$0xff] %vm794, %v1897
      %1915 = vst.msk [vmem:[%s602 + $0x78] sm:$0xff] %vm794, %v1899
      %v1916 = vadd.f32 %v1334, 1.0
      %v1917 = vadd.f32 %v1337, 1.0
      %v1918 = vadd.f32 %v1342, 1.0
      %v1919 = vadd.f32 %v1345, 1.0
      %v1920 = vadd.f32 %v1350, 1.0
      %v1921 = vadd.f32 %v1353, 1.0
      %v1922 = vadd.f32 %v1358, 1.0
      %v1923 = vadd.f32 %v1361, 1.0
      %v1924 = vadd.f32 %v1366, 1.0
      %v1925 = vadd.f32 %v1369, 1.0
      %v1926 = vadd.f32 %v1374, 1.0
      %v1927 = vadd.f32 %v1377, 1.0
      %v1928 = vadd.f32 %v1382, 1.0
      %v1929 = vadd.f32 %v1385, 1.0
      %v1930 = vadd.f32 %v1390, 1.0
      %v1931 = vadd.f32 %v1393, 1.0
      %v1932 = vmul.f32 %v1214, %v1214
      %v1933 = vmul.f32 %v1217, %v1217
      %v1934 = vmul.f32 %v1222, %v1222
      %v1935 = vmul.f32 %v1225, %v1225
      %v1936 = vmul.f32 %v1230, %v1230
      %v1937 = vmul.f32 %v1233, %v1233
      %v1938 = vmul.f32 %v1238, %v1238
      %v1939 = vmul.f32 %v1241, %v1241
      %v1940 = vmul.f32 %v1246, %v1246
      %v1941 = vmul.f32 %v1249, %v1249
      %v1942 = vmul.f32 %v1254, %v1254
      %v1943 = vmul.f32 %v1257, %v1257
      %v1944 = vmul.f32 %v1262, %v1262
      %v1945 = vmul.f32 %v1265, %v1265
      %v1946 = vmul.f32 %v1270, %v1270
      %v1947 = vmul.f32 %v1273, %v1273
      %v1948 = vsub.f32 %v1916, %v1932
      %v1949 = vsub.f32 %v1917, %v1933
      %v1950 = vsub.f32 %v1918, %v1934
      %v1951 = vsub.f32 %v1919, %v1935
      %v1952 = vsub.f32 %v1920, %v1936
      %v1953 = vsub.f32 %v1921, %v1937
      %v1954 = vsub.f32 %v1922, %v1938
      %v1955 = vsub.f32 %v1923, %v1939
      %v1956 = vsub.f32 %v1924, %v1940
      %v1957 = vsub.f32 %v1925, %v1941
      %v1958 = vsub.f32 %v1926, %v1942
      %v1959 = vsub.f32 %v1927, %v1943
      %v1960 = vsub.f32 %v1928, %v1944
      %v1961 = vsub.f32 %v1929, %v1945
      %v1962 = vsub.f32 %v1930, %v1946
      %v1963 = vsub.f32 %v1931, %v1947
      %v1964 = vmul.f32 %v1413, %v1413
      %v1965 = vmul.f32 %v1415, %v1415
      %v1966 = vmul.f32 %v1417, %v1417
      %v1967 = vmul.f32 %v1419, %v1419
      %v1968 = vmul.f32 %v1421, %v1421
      %v1969 = vmul.f32 %v1423, %v1423
      %v1970 = vmul.f32 %v1425, %v1425
      %v1971 = vmul.f32 %v1427, %v1427
      %v1972 = vmul.f32 %v1429, %v1429
      %v1973 = vmul.f32 %v1431, %v1431
      %v1974 = vmul.f32 %v1433, %v1433
      %v1975 = vmul.f32 %v1435, %v1435
      %v1976 = vmul.f32 %v1437, %v1437
      %v1977 = vmul.f32 %v1439, %v1439
      %v1978 = vmul.f32 %v1441, %v1441
      %v1979 = vmul.f32 %v1443, %v1443
      %v1980 = vsub.f32 %v1948, %v1964
      %v1981 = vsub.f32 %v1949, %v1965
      %v1982 = vsub.f32 %v1950, %v1966
      %v1983 = vsub.f32 %v1951, %v1967
      %v1984 = vsub.f32 %v1952, %v1968
      %v1985 = vsub.f32 %v1953, %v1969
      %v1986 = vsub.f32 %v1954, %v1970
      %v1987 = vsub.f32 %v1955, %v1971
      %v1988 = vsub.f32 %v1956, %v1972
      %v1989 = vsub.f32 %v1957, %v1973
      %v1990 = vsub.f32 %v1958, %v1974
      %v1991 = vsub.f32 %v1959, %v1975
      %v1992 = vsub.f32 %v1960, %v1976
      %v1993 = vsub.f32 %v1961, %v1977
      %v1994 = vsub.f32 %v1962, %v1978
      %v1995 = vsub.f32 %v1963, %v1979
      %v1996 = vsel %vm794, %v1980, 0.0
      %1997 = vadd.xlane.f32.xlu0 %v1996
      %v1998 = vpop.xlane.xlu0 %1997
      %v1999 = vsel %vm794, %v1981, 0.0
      %2000 = vadd.xlane.f32.xlu0 %v1999
      %v2001 = vpop.xlane.xlu0 %2000
      %v2002 = vsel %vm794, %v1982, 0.0
      %2003 = vadd.xlane.f32.xlu0 %v2002
      %v2004 = vpop.xlane.xlu0 %2003
      %v2005 = vsel %vm794, %v1983, 0.0
      %2006 = vadd.xlane.f32.xlu0 %v2005
      %v2007 = vpop.xlane.xlu0 %2006
      %v2008 = vsel %vm794, %v1984, 0.0
      %2009 = vadd.xlane.f32.xlu0 %v2008
      %v2010 = vpop.xlane.xlu0 %2009
      %v2011 = vsel %vm794, %v1985, 0.0
      %2012 = vadd.xlane.f32.xlu0 %v2011
      %v2013 = vpop.xlane.xlu0 %2012
      %v2014 = vsel %vm794, %v1986, 0.0
      %2015 = vadd.xlane.f32.xlu0 %v2014
      %v2016 = vpop.xlane.xlu0 %2015
      %v2017 = vsel %vm794, %v1987, 0.0
      %2018 = vadd.xlane.f32.xlu0 %v2017
      %v2019 = vpop.xlane.xlu0 %2018
      %v2020 = vsel %vm794, %v1988, 0.0
      %2021 = vadd.xlane.f32.xlu0 %v2020
      %v2022 = vpop.xlane.xlu0 %2021
      %v2023 = vsel %vm794, %v1989, 0.0
      %2024 = vadd.xlane.f32.xlu0 %v2023
      %v2025 = vpop.xlane.xlu0 %2024
      %v2026 = vsel %vm794, %v1990, 0.0
      %2027 = vadd.xlane.f32.xlu0 %v2026
      %v2028 = vpop.xlane.xlu0 %2027
      %v2029 = vsel %vm794, %v1991, 0.0
      %2030 = vadd.xlane.f32.xlu0 %v2029
      %v2031 = vpop.xlane.xlu0 %2030
      %v2032 = vsel %vm794, %v1992, 0.0
      %2033 = vadd.xlane.f32.xlu0 %v2032
      %v2034 = vpop.xlane.xlu0 %2033
      %v2035 = vsel %vm794, %v1993, 0.0
      %2036 = vadd.xlane.f32.xlu0 %v2035
      %v2037 = vpop.xlane.xlu0 %2036
      %v2038 = vsel %vm794, %v1994, 0.0
      %2039 = vadd.xlane.f32.xlu0 %v2038
      %v2040 = vpop.xlane.xlu0 %2039
      %v2041 = vsel %vm794, %v1995, 0.0
      %2042 = vadd.xlane.f32.xlu0 %v2041
      %v2043 = vpop.xlane.xlu0 %2042
      %v2044 = vmul.f32 %v1998, -0.5
      %v2045 = vmul.f32 %v2001, -0.5
      %v2046 = vmul.f32 %v2004, -0.5
      %v2047 = vmul.f32 %v2007, -0.5
      %v2048 = vmul.f32 %v2010, -0.5
      %v2049 = vmul.f32 %v2013, -0.5
      %v2050 = vmul.f32 %v2016, -0.5
      %v2051 = vmul.f32 %v2019, -0.5
      %v2052 = vmul.f32 %v2022, -0.5
      %v2053 = vmul.f32 %v2025, -0.5
      %v2054 = vmul.f32 %v2028, -0.5
      %v2055 = vmul.f32 %v2031, -0.5
      %v2056 = vmul.f32 %v2034, -0.5
      %v2057 = vmul.f32 %v2037, -0.5
      %v2058 = vmul.f32 %v2040, -0.5
      %v2059 = vmul.f32 %v2043, -0.5
      %vm2060 = vcmask 7168
      %2061 = vst.msk [vmem:[%s608] sm:$0xff] %vm2060, %v2044
      %2062 = vst.msk [vmem:[%s608 + $0x8] sm:$0xff] %vm2060, %v2045
      %2063 = vst.msk [vmem:[%s608 + $0x10] sm:$0xff] %vm2060, %v2046
      %2064 = vst.msk [vmem:[%s608 + $0x18] sm:$0xff] %vm2060, %v2047
      %2065 = vst.msk [vmem:[%s608 + $0x20] sm:$0xff] %vm2060, %v2048
      %2066 = vst.msk [vmem:[%s608 + $0x28] sm:$0xff] %vm2060, %v2049
      %2067 = vst.msk [vmem:[%s608 + $0x30] sm:$0xff] %vm2060, %v2050
      %2068 = vst.msk [vmem:[%s608 + $0x38] sm:$0xff] %vm2060, %v2051
      %2069 = vst.msk [vmem:[%s608 + $0x40] sm:$0xff] %vm2060, %v2052
      %2070 = vst.msk [vmem:[%s608 + $0x48] sm:$0xff] %vm2060, %v2053
      %2071 = vst.msk [vmem:[%s608 + $0x50] sm:$0xff] %vm2060, %v2054
      %2072 = vst.msk [vmem:[%s608 + $0x58] sm:$0xff] %vm2060, %v2055
      %2073 = vst.msk [vmem:[%s608 + $0x60] sm:$0xff] %vm2060, %v2056
      %2074 = vst.msk [vmem:[%s608 + $0x68] sm:$0xff] %vm2060, %v2057
      %2075 = vst.msk [vmem:[%s608 + $0x70] sm:$0xff] %vm2060, %v2058
      %2076 = vst.msk [vmem:[%s608 + $0x78] sm:$0xff] %vm2060, %v2059
      %s2077 = smul.u32 16, %s29
      %p2078 = scmp.lt.s32.totalorder %s2077, 31
      %s2079 = scalar_select %p2078, %s2077, 31
      %s2080 = smul.addr %s2079, 8
      %s2081 = scalar_lea.vmem %s16, %s2080
      %s2082 = smul.u32 16, %s29
      %p2083 = scmp.lt.s32.totalorder %s2082, 31
      %s2084 = scalar_select %p2083, %s2082, 31
      %s2085 = smul.addr %s2084, 8
      %s2086 = scalar_lea.vmem %s17, %s2085
      // Predicated region
      $region85: #{tpu_custom_call.1} parent=83 // pred_check
        %p2087 = pneg %p398
      $region86: #{tpu_custom_call.1} parent=83 // pred_check_branch
        %2089 = sbr.rel (%p2087) target = $region88
      $region87: #{tpu_custom_call.1} parent=83 // pred_region
        %s2090 = smul.u32 16, %s29
      $region88: #{tpu_custom_call.1} parent=83 // pred_fallthru
        _
      // Predicated region
      $region89: #{tpu_custom_call.1} parent=83 // pred_check
        %p2091 = pneg %p424
      $region90: #{tpu_custom_call.1} parent=83 // pred_check_branch
        %2093 = sbr.rel (%p2091) target = $region92
      $region91: #{tpu_custom_call.1} parent=83 // pred_region
        %s2094 = smul.u32 16, %s29
      $region92: #{tpu_custom_call.1} parent=83 // pred_fallthru
        _
    $region84: #{tpu_custom_call.1} parent=5 // pred_fallthru
      _
    %p2095 = scmp.le.s32.totalorder 2, %s24
    // Predicated region
    $region93: #{tpu_custom_call.1} parent=5 // pred_check
      %p2096 = pneg %p2095
    $region94: #{tpu_custom_call.1} parent=5 // pred_check_branch
      %2098 = sbr.rel (%p2096) target = $region96
    $region95: #{tpu_custom_call.1} parent=5 // pred_region
      %s2099 = ssub.s32 %s24, 2
      // Predicated region
      $region97: #{tpu_custom_call.1} parent=95 // pred_check
        %p2100 = pneg %p404
      $region98: #{tpu_custom_call.1} parent=95 // pred_check_branch
        %2102 = sbr.rel (%p2100) target = $region100
      $region99: #{tpu_custom_call.1} parent=95 // pred_region
        %s2103 = smul.u32 16, %s30
        %p2104 = scmp.lt.s32.totalorder %s2103, 31
        %s2105 = scalar_select %p2104, %s2103, 31
        %s2106 = smul.addr %s2105, 8
        %s2107 = scalar_lea.vmem %s16, %s2106
      $region100: #{tpu_custom_call.1} parent=95 // pred_fallthru
        _
      // Predicated region
      $region101: #{tpu_custom_call.1} parent=95 // pred_check
        %p2108 = pneg %p430
      $region102: #{tpu_custom_call.1} parent=95 // pred_check_branch
        %2110 = sbr.rel (%p2108) target = $region104
      $region103: #{tpu_custom_call.1} parent=95 // pred_region
        %s2111 = smul.u32 16, %s30
        %p2112 = scmp.lt.s32.totalorder %s2111, 31
        %s2113 = scalar_select %p2112, %s2111, 31
        %s2114 = smul.addr %s2113, 8
        %s2115 = scalar_lea.vmem %s17, %s2114
      $region104: #{tpu_custom_call.1} parent=95 // pred_fallthru
        _
    $region96: #{tpu_custom_call.1} parent=5 // pred_fallthru
      _
  $region6: #{tpu_custom_call.1} parent=0 // loop_footer
    %s28 = sadd.s32 1, %s24
  $region7: #{tpu_custom_call.1} parent=0 // loop_footer_branch
    %23 = sbr.rel target = $region3
  $region8: #{tpu_custom_call.1} parent=0 // loop_exit
    _

</llo_original>
